<compile_context>
chip_gen: v7x
topology: tpu7x:2x2x1
jax: 0.10.0
libtpu: 0.0.40
codegen_flags: <defaults>
</compile_context>

<pallas_src>
import numpy as np
import jax
import jax.numpy as jnp
from jax.experimental import pallas as pl
from jax.experimental.pallas import tpu as pltpu

ATOM_FDIM = 16   # atom feature dim
BOND_FDIM = 24   # bond feature dim (atom_fdim + bond-only features)
HIDDEN    = 32   # hidden size
HP        = 128  # hidden padded to full lane width (lane-dense vregs/stores)
DEPTH     = 3    # message passing depth (>= 2)
TB        = 128  # bond-row tile for streaming Mc (MXU-height, int8/bf16 safe)
TA        = 128  # atom-row tile for the readout pass


# --------------------------------------------------------------------------
# Kernel 1: depth loop.  grid = (DEPTH-1, n_bond_tiles), both sequential.
# Messages live in persistent VMEM ping-pong buffers; the buffer holding the
# final message is the pallas_call OUTPUT (chosen by parity at trace time).
# --------------------------------------------------------------------------
def mpn_depth_kernel(f_bonds_ref, Wi_ref, Wh_ref, Mc_ref,
                     msg_out_ref, inp_ref, msg_scr_ref):
    d = pl.program_id(0)            # depth step (sequential)
    t = pl.program_id(1)            # bond-row tile (streams Mc rows)

    n_steps = DEPTH - 1
    # message before step 0 lives in `cur0`; after n_steps ping-pong steps the
    # final message is in cur0 if n_steps is even, in buf1 if odd.
    if n_steps % 2 == 0:
        cur0, buf1 = msg_out_ref, msg_scr_ref
    else:
        cur0, buf1 = msg_scr_ref, msg_out_ref

    # ---- prologue (runs once): input = W_i(f_bonds); message0 = ReLU(input)
    @pl.when(jnp.logical_and(d == 0, t == 0))
    def _():
        inp = jnp.dot(f_bonds_ref[...], Wi_ref[...],
                      preferred_element_type=jnp.float32)         # [Nb, HP] f32
        inp_ref[...] = inp
        cur0[...] = jnp.maximum(inp, 0.0).astype(jnp.bfloat16)

    row0 = pl.multiple_of(t * TB, TB)

    # One depth step for this bond tile:
    #   new_msg[tile] = ReLU(inp[tile] + (Mc[tile, :] @ old_msg) @ W_h)
    # Mc = B2A @ A - R fuses the a2b-sum, b2a-gather and b2revb-subtract of
    # the reference into a single streamed matmul.
    def depth_step(old_ref, new_ref):
        mc_bf = Mc_ref[...].astype(jnp.bfloat16)                  # int8 -> bf16
        agg = jnp.dot(mc_bf, old_ref[...],
                      preferred_element_type=jnp.float32)         # [TB, HP]
        h = jnp.dot(agg.astype(jnp.bfloat16), Wh_ref[...],
                    preferred_element_type=jnp.float32)           # [TB, HP]
        new_ref[pl.ds(row0, TB), :] = jnp.maximum(
            inp_ref[pl.ds(row0, TB), :] + h, 0.0).astype(jnp.bfloat16)
        # dropout is identity in eval mode; not modeled.

    @pl.when(d % 2 == 0)
    def _():
        depth_step(cur0, buf1)

    @pl.when(d % 2 == 1)
    def _():
        depth_step(buf1, cur0)


# --------------------------------------------------------------------------
# Kernel 2: readout.  grid = (n_atom_tiles,), accumulating into the molecule
# output block.  Runs after the depth loop so A / S / f_atoms / W_o never sit
# in VMEM while the depth loop is streaming Mc.
# --------------------------------------------------------------------------
def mpn_readout_kernel(msg_ref, f_atoms_ref, A_ref, Woa_ref, Wom_ref, bo_ref,
                       S_ref, out_ref):
    t = pl.program_id(0)

    @pl.when(t == 0)
    def _():
        out_ref[...] = jnp.zeros_like(out_ref)

    # per-atom incoming-message sum for this atom tile
    a_msg = jnp.dot(A_ref[...], msg_ref[...],
                    preferred_element_type=jnp.float32)           # [TA, HP]
    # atom_hiddens = ReLU(W_o([f_atoms, a_message]) + b_o); concat folded into
    # the split (Woa, Wom).  Bias add / ReLU / mean stay f32.
    atom_hiddens = jnp.maximum(
        jnp.dot(f_atoms_ref[...], Woa_ref[...],
                preferred_element_type=jnp.float32)
        + jnp.dot(a_msg.astype(jnp.bfloat16), Wom_ref[...],
                  preferred_element_type=jnp.float32)
        + bo_ref[...], 0.0)                                       # [TA, HP] f32
    # per-molecule mean readout: rows of S are 1/a_size indicators (f32 path).
    out_ref[...] += jnp.dot(S_ref[...], atom_hiddens,
                            preferred_element_type=jnp.float32)   # [M, HP]


# --------------------------------------------------------------------------
# VMEM budgets computed from the padded graph size (v7x-safe 64 MiB cap).
# --------------------------------------------------------------------------
def _depth_vmem_budget(nb_pad):
    est = (3 * TB * nb_pad              # streamed int8 Mc tiles (buffered)
           + 2 * nb_pad * HP * 2        # f_bonds resident (lane-padded bf16)
           + 4 * HP * HP * 2            # W_i / W_h resident
           + nb_pad * HP * 4            # inp scratch (f32)
           + nb_pad * HP * 2            # msg ping-pong scratch (bf16)
           + 2 * nb_pad * HP * 2)       # msg output block (bf16)
    est = int(1.5 * est) + (4 << 20)
    # Cap at 64 MiB so the budget is valid on v7x; on v5e/v6e with very large
    # graphs this could be raised toward ~100 MiB (and Mc made resident).
    return int(min(max(est, 16 << 20), 64 << 20))


def _readout_vmem_budget(nb_pad, m_pad):
    est = (2 * nb_pad * HP * 2          # msg_final resident
           + 2 * TA * nb_pad * 2        # A tiles
           + 2 * TA * HP * 2            # f_atoms tiles (lane padded)
           + 4 * HP * HP * 2            # W_o halves
           + 2 * max(m_pad, 8) * TA * 4 # S tiles
           + 2 * max(m_pad, 8) * HP * 4)  # output block
    est = int(1.5 * est) + (4 << 20)
    return int(min(max(est, 16 << 20), 64 << 20))


def mpn_forward(f_bonds, f_atoms, Mc_i8, A, S, Wi, Wh, Woa, Wom, bo):
    assert DEPTH >= 2
    nb_pad = Mc_i8.shape[0]
    na_pad = A.shape[0]
    m_pad = S.shape[0]
    assert nb_pad % TB == 0 and na_pad % TA == 0
    nt = nb_pad // TB
    nta = na_pad // TA

    # ---- phase 1: depth loop over bond messages -> final bond message slab
    msg_final = pl.pallas_call(
        mpn_depth_kernel,
        out_shape=jax.ShapeDtypeStruct((nb_pad, HP), jnp.bfloat16),
        grid=(DEPTH - 1, nt),
        in_specs=[
            pl.BlockSpec((nb_pad, BOND_FDIM), lambda d, t: (0, 0)),  # f_bonds
            pl.BlockSpec((BOND_FDIM, HP),     lambda d, t: (0, 0)),  # W_i
            pl.BlockSpec((HP, HP),            lambda d, t: (0, 0)),  # W_h
            pl.BlockSpec((TB, nb_pad),        lambda d, t: (t, 0)),  # Mc (int8)
        ],
        out_specs=pl.BlockSpec((nb_pad, HP),  lambda d, t: (0, 0)),
        scratch_shapes=[
            pltpu.VMEM((nb_pad, HP), jnp.float32),    # inp = W_i(f_bonds)
            pltpu.VMEM((nb_pad, HP), jnp.bfloat16),   # msg ping-pong scratch
        ],
        compiler_params=pltpu.CompilerParams(
            # both axes carry dependencies through the persistent message
            # buffers -> sequential ("arbitrary").
            dimension_semantics=("arbitrary", "arbitrary"),
            vmem_limit_bytes=_depth_vmem_budget(nb_pad)),
    )(f_bonds, Wi, Wh, Mc_i8)

    # ---- phase 2: readout (A @ msg, W_o, per-molecule mean), tiled over atoms
    out = pl.pallas_call(
        mpn_readout_kernel,
        out_shape=jax.ShapeDtypeStruct((m_pad, HP), jnp.float32),
        grid=(nta,),
        in_specs=[
            pl.BlockSpec((nb_pad, HP),    lambda t: (0, 0)),   # msg_final
            pl.BlockSpec((TA, ATOM_FDIM), lambda t: (t, 0)),   # f_atoms
            pl.BlockSpec((TA, nb_pad),    lambda t: (t, 0)),   # A
            pl.BlockSpec((ATOM_FDIM, HP), lambda t: (0, 0)),   # W_o (atom part)
            pl.BlockSpec((HP, HP),        lambda t: (0, 0)),   # W_o (msg part)
            pl.BlockSpec((1, HP),         lambda t: (0, 0)),   # b_o
            pl.BlockSpec((m_pad, TA),     lambda t: (0, t)),   # S (f32)
        ],
        out_specs=pl.BlockSpec((m_pad, HP), lambda t: (0, 0)),
        compiler_params=pltpu.CompilerParams(
            dimension_semantics=("arbitrary",),
            vmem_limit_bytes=_readout_vmem_budget(nb_pad, m_pad)),
    )(msg_final, f_atoms, A, Woa, Wom, bo, S)
    return out


def mpn_reference(f_atoms, f_bonds, a2b, b2a, b2revb, a_scope, Wi, Wh, Wo, bo):
    """Pure-JAX f32 reference mirroring PyTorch MPNEncoder.forward exactly."""
    inp = f_bonds @ Wi
    message = jnp.maximum(inp, 0.0)
    for _ in range(DEPTH - 1):
        nei_a_message = message[a2b]            # [Na, max_nb, H]
        a_message = nei_a_message.sum(axis=1)   # [Na, H]
        rev_message = message[b2revb]           # [Nb, H]
        message = a_message[b2a] - rev_message
        message = message @ Wh
        message = jnp.maximum(inp + message, 0.0)
    nei_a_message = message[a2b]
    a_message = nei_a_message.sum(axis=1)
    a_input = jnp.concatenate([f_atoms, a_message], axis=1)
    atom_hiddens = jnp.maximum(a_input @ Wo + bo, 0.0)
    mol_vecs = []
    for (a_start, a_size) in a_scope:
        cur = atom_hiddens[a_start:a_start + a_size]
        mol_vecs.append(cur.sum(axis=0) / a_size)   # aggregation='mean'
    return jnp.stack(mol_vecs, axis=0)


if __name__ == "__main__":
    key = jax.random.PRNGKey(0)
    k_fa, k_fb, k_wi, k_wh, k_wo, k_bo = jax.random.split(key, 6)

    # --- synthetic BatchMolGraph (chemprop convention: row 0 is zero padding)
    # molecule 1: atoms 1,2,3 with bonds (1-2),(2-3) -> directed bonds 1..4
    # molecule 2: atoms 4,5   with bond  (4-5)       -> directed bonds 5,6
    N_A, N_B, MAX_NB = 8, 8, 3
    NA_PAD, NB_PAD, M_PAD = 256, 256, 8     # padded to TA/TB multiples
    a2b = np.zeros((N_A, MAX_NB), dtype=np.int32)
    a2b[1, :1] = [2]
    a2b[2, :2] = [1, 4]
    a2b[3, :1] = [3]
    a2b[4, :1] = [6]
    a2b[5, :1] = [5]
    b2a    = np.array([0, 1, 2, 2, 3, 4, 5, 0], dtype=np.int32)
    b2revb = np.array([0, 2, 1, 4, 3, 6, 5, 0], dtype=np.int32)
    a_scope = [(1, 3), (4, 2)]
    n_mols = len(a_scope)

    def snap_bf16(x):  # make test inputs exactly bf16-representable
        return jnp.asarray(x, jnp.bfloat16).astype(jnp.float32)

    f_atoms = snap_bf16(jax.random.normal(k_fa, (N_A, ATOM_FDIM), jnp.float32))
    f_atoms = f_atoms.at[0].set(0.0).at[6:].set(0.0)
    f_bonds = snap_bf16(jax.random.normal(k_fb, (N_B, BOND_FDIM), jnp.float32))
    f_bonds = f_bonds.at[0].set(0.0).at[7:].set(0.0)

    # --- dense equivalents of the integer gathers (built at padded sizes) ---
    A_np = np.zeros((NA_PAD, NB_PAD), dtype=np.float32)
    for a in range(N_A):
        for b in a2b[a]:
            A_np[a, b] += 1.0
    A_np[:, 0] = 0.0                 # zero-padding bond column (robustness)
    B2A_np = np.zeros((NB_PAD, NA_PAD), dtype=np.float32)
    B2A_np[np.arange(N_B), b2a] = 1.0
    R_np = np.zeros((NB_PAD, NB_PAD), dtype=np.float32)
    R_np[np.arange(N_B), b2revb] = 1.0
    Mc_np = B2A_np @ A_np - R_np     # fused incidence operator, entries in {-1,0,1}
    Mc_i8 = Mc_np.astype(np.int8)    # exact (integer-valued) -> int8 HBM stream
    S_np = np.zeros((M_PAD, NA_PAD), dtype=np.float32)
    for i, (a_start, a_size) in enumerate(a_scope):
        S_np[i, a_start:a_start + a_size] = 1.0 / a_size
    # TODO(synk): cached_zero_vector for molecules with a_size == 0 not modeled.

    # --- parameters (W_i, W_h bias=False; W_o has bias) ---
    Wi = snap_bf16(jax.random.normal(k_wi, (BOND_FDIM, HIDDEN), jnp.float32) * 0.1)
    Wh = snap_bf16(jax.random.normal(k_wh, (HIDDEN, HIDDEN), jnp.float32) * 0.1)
    Wo = snap_bf16(jax.random.normal(k_wo, (ATOM_FDIM + HIDDEN, HIDDEN), jnp.float32) * 0.1)
    bo = snap_bf16(jax.random.normal(k_bo, (1, HIDDEN), jnp.float32) * 0.1)

    # --- pad rows and the hidden dim to the lane-dense HP=128 layout ---
    f_atoms_p = jnp.zeros((NA_PAD, ATOM_FDIM), jnp.float32).at[:N_A].set(f_atoms)
    f_bonds_p = jnp.zeros((NB_PAD, BOND_FDIM), jnp.float32).at[:N_B].set(f_bonds)
    Wi_p  = jnp.zeros((BOND_FDIM, HP), jnp.float32).at[:, :HIDDEN].set(Wi)
    Wh_p  = jnp.zeros((HP, HP), jnp.float32).at[:HIDDEN, :HIDDEN].set(Wh)
    Woa_p = jnp.zeros((ATOM_FDIM, HP), jnp.float32).at[:, :HIDDEN].set(Wo[:ATOM_FDIM])
    Wom_p = jnp.zeros((HP, HP), jnp.float32).at[:HIDDEN, :HIDDEN].set(Wo[ATOM_FDIM:])
    bo_p  = jnp.zeros((1, HP), jnp.float32).at[:, :HIDDEN].set(bo)

    bf = lambda x: jnp.asarray(x, jnp.bfloat16)
    out_padded = mpn_forward(
        bf(f_bonds_p), bf(f_atoms_p), jnp.asarray(Mc_i8),
        bf(A_np), jnp.asarray(S_np, jnp.float32),
        bf(Wi_p), bf(Wh_p), bf(Woa_p), bf(Wom_p),
        jnp.asarray(bo_p, jnp.float32))
    out_padded = jax.block_until_ready(out_padded)
    out = out_padded[:n_mols, :HIDDEN]

    ref = mpn_reference(f_atoms, f_bonds,
                        jnp.asarray(a2b), jnp.asarray(b2a), jnp.asarray(b2revb),
                        a_scope, Wi, Wh, Wo, bo[0])
    ref = jax.block_until_ready(ref)

    assert out.shape == (n_mols, HIDDEN)
    # bf16 MXU operands with f32 accumulation vs. pure-f32 reference
    np.testing.assert_allclose(np.asarray(out), np.asarray(ref),
                               rtol=5e-2, atol=5e-2)
    print("KERNEL_OK")
</pallas_src>

<mosaic_0001>
module attributes {stable_mosaic.version = 11 : i64} {
  func.func @mpn_depth_kernel(%arg0: i32, %arg1: i32, %arg2: memref<256x24xbf16, #tpu.memory_space<vmem>>, %arg3: memref<24x128xbf16, #tpu.memory_space<vmem>>, %arg4: memref<128x128xbf16, #tpu.memory_space<vmem>>, %arg5: memref<128x256xi8, #tpu.memory_space<vmem>>, %arg6: memref<256x128xbf16, #tpu.memory_space<vmem>>, %arg7: memref<256x128xf32, #tpu.memory_space<vmem>>, %arg8: memref<256x128xbf16, #tpu.memory_space<vmem>>) attributes {dimension_semantics = [#tpu.dimension_semantics<arbitrary>, #tpu.dimension_semantics<arbitrary>], iteration_bounds = array<i64: 2, 2>, scalar_prefetch = 0 : i64, scratch_operands = 2 : i64, tpu.core_type = #tpu.core_type<tc>, window_params = [{pipeline_mode = #tpu.pipeline_mode<synchronous>, transform_indices = @transform_0, window_bounds = array<i64: 256, 24>}, {pipeline_mode = #tpu.pipeline_mode<synchronous>, transform_indices = @transform_1, window_bounds = array<i64: 24, 128>}, {pipeline_mode = #tpu.pipeline_mode<synchronous>, transform_indices = @transform_2, window_bounds = array<i64: 128, 128>}, {transform_indices = @transform_3, window_bounds = array<i64: 128, 256>}, {pipeline_mode = #tpu.pipeline_mode<synchronous>, transform_indices = @transform_4, window_bounds = array<i64: 256, 128>}]} {
    %c0_i32 = arith.constant 0 : i32
    %0 = arith.cmpi eq, %arg0, %c0_i32 : i32
    %c0_i32_0 = arith.constant 0 : i32
    %1 = arith.cmpi eq, %arg1, %c0_i32_0 : i32
    %2 = arith.andi %0, %1 : i1
    %3 = arith.extui %2 : i1 to i32
    %c0_i32_1 = arith.constant 0 : i32
    %4 = arith.cmpi ne, %3, %c0_i32_1 : i32
    scf.if %4 {
      %c0 = arith.constant 0 : index
      %c0_16 = arith.constant 0 : index
      %33 = vector.load %arg2[%c0, %c0_16] : memref<256x24xbf16, #tpu.memory_space<vmem>>, vector<256x24xbf16>
      %c0_17 = arith.constant 0 : index
      %c0_18 = arith.constant 0 : index
      %34 = vector.load %arg3[%c0_17, %c0_18] : memref<24x128xbf16, #tpu.memory_space<vmem>>, vector<24x128xbf16>
      %cst = arith.constant dense<0.000000e+00> : vector<256x128xf32>
      %35 = tpu.matmul %33, %34, %cst {dimension_numbers = #tpu.dot_dimension_numbers<[1], [0], [0], [1], [0, 0, 1, 1], [], []>} : vector<256x24xbf16>, vector<24x128xbf16>, vector<256x128xf32> -> vector<256x128xf32>
      %c0_19 = arith.constant 0 : index
      %c0_20 = arith.constant 0 : index
      %36 = vector.load %arg7[%c0_19, %c0_20] : memref<256x128xf32, #tpu.memory_space<vmem>>, vector<256x128xf32>
      tpu.vector_store %arg7[%c0_19, %c0_20], %35 {strides = array<i32>} : memref<256x128xf32, #tpu.memory_space<vmem>>, vector<256x128xf32>,
      %cst_21 = arith.constant 0.000000e+00 : f32
      %37 = vector.broadcast %cst_21 : f32 to vector<256x128xf32>
      %38 = arith.maximumf %35, %37 : vector<256x128xf32>
      %39 = arith.truncf %38 : vector<256x128xf32> to vector<256x128xbf16>
      %c0_22 = arith.constant 0 : index
      %c0_23 = arith.constant 0 : index
      %40 = vector.load %arg6[%c0_22, %c0_23] : memref<256x128xbf16, #tpu.memory_space<vmem>>, vector<256x128xbf16>
      tpu.vector_store %arg6[%c0_22, %c0_23], %39 {strides = array<i32>} : memref<256x128xbf16, #tpu.memory_space<vmem>>, vector<256x128xbf16>,
    } else {
    }
    %c128_i32 = arith.constant 128 : i32
    %5 = arith.muli %arg1, %c128_i32 : i32
    %6 = tpu.assume_multiple %5, 128 : i32
    %c2_i32 = arith.constant 2 : i32
    %c0_i32_2 = arith.constant 0 : i32
    %7 = arith.cmpi eq, %c2_i32, %c0_i32_2 : i32
    %c1_i32 = arith.constant 1 : i32
    %8 = arith.select %7, %c1_i32, %c2_i32 : i32
    %9 = arith.remsi %arg0, %8 : i32
    %c0_i32_3 = arith.constant 0 : i32
    %10 = arith.cmpi ne, %9, %c0_i32_3 : i32
    %c0_i32_4 = arith.constant 0 : i32
    %11 = arith.cmpi slt, %9, %c0_i32_4 : i32
    %c0_i32_5 = arith.constant 0 : i32
    %12 = arith.cmpi slt, %8, %c0_i32_5 : i32
    %13 = arith.xori %11, %12 : i1
    %14 = arith.andi %13, %10 : i1
    %15 = arith.addi %9, %8 : i32
    %16 = arith.select %14, %15, %9 : i32
    %c0_i32_6 = arith.constant 0 : i32
    %17 = arith.cmpi eq, %16, %c0_i32_6 : i32
    %18 = arith.extui %17 : i1 to i32
    %c0_i32_7 = arith.constant 0 : i32
    %19 = arith.cmpi ne, %18, %c0_i32_7 : i32
    scf.if %19 {
      %c0 = arith.constant 0 : index
      %c0_16 = arith.constant 0 : index
      %33 = vector.load %arg5[%c0, %c0_16] : memref<128x256xi8, #tpu.memory_space<vmem>>, vector<128x256xi8>
      %34 = arith.sitofp %33 : vector<128x256xi8> to vector<128x256xbf16>
      %c0_17 = arith.constant 0 : index
      %c0_18 = arith.constant 0 : index
      %35 = vector.load %arg6[%c0_17, %c0_18] : memref<256x128xbf16, #tpu.memory_space<vmem>>, vector<256x128xbf16>
      %cst = arith.constant dense<0.000000e+00> : vector<128x128xf32>
      %36 = tpu.matmul %34, %35, %cst {dimension_numbers = #tpu.dot_dimension_numbers<[1], [0], [0], [1], [0, 0, 1, 1], [], []>} : vector<128x256xbf16>, vector<256x128xbf16>, vector<128x128xf32> -> vector<128x128xf32>
      %37 = arith.truncf %36 : vector<128x128xf32> to vector<128x128xbf16>
      %c0_19 = arith.constant 0 : index
      %c0_20 = arith.constant 0 : index
      %38 = vector.load %arg4[%c0_19, %c0_20] : memref<128x128xbf16, #tpu.memory_space<vmem>>, vector<128x128xbf16>
      %cst_21 = arith.constant dense<0.000000e+00> : vector<128x128xf32>
      %39 = tpu.matmul %37, %38, %cst_21 {dimension_numbers = #tpu.dot_dimension_numbers<[1], [0], [0], [1], [0, 0, 1, 1], [], []>} : vector<128x128xbf16>, vector<128x128xbf16>, vector<128x128xf32> -> vector<128x128xf32>
      %40 = arith.index_cast %6 : i32 to index
      %c0_22 = arith.constant 0 : index
      %41 = vector.load %arg7[%40, %c0_22] : memref<256x128xf32, #tpu.memory_space<vmem>>, vector<128x128xf32>
      %42 = arith.addf %41, %39 : vector<128x128xf32>
      %cst_23 = arith.constant 0.000000e+00 : f32
      %43 = vector.broadcast %cst_23 : f32 to vector<128x128xf32>
      %44 = arith.maximumf %42, %43 : vector<128x128xf32>
      %45 = arith.truncf %44 : vector<128x128xf32> to vector<128x128xbf16>
      %46 = arith.index_cast %6 : i32 to index
      %c0_24 = arith.constant 0 : index
      %47 = vector.load %arg8[%46, %c0_24] : memref<256x128xbf16, #tpu.memory_space<vmem>>, vector<128x128xbf16>
      tpu.vector_store %arg8[%46, %c0_24], %45 {strides = array<i32>} : memref<256x128xbf16, #tpu.memory_space<vmem>>, vector<128x128xbf16>,
    } else {
    }
    %c2_i32_8 = arith.constant 2 : i32
    %c0_i32_9 = arith.constant 0 : i32
    %20 = arith.cmpi eq, %c2_i32_8, %c0_i32_9 : i32
    %c1_i32_10 = arith.constant 1 : i32
    %21 = arith.select %20, %c1_i32_10, %c2_i32_8 : i32
    %22 = arith.remsi %arg0, %21 : i32
    %c0_i32_11 = arith.constant 0 : i32
    %23 = arith.cmpi ne, %22, %c0_i32_11 : i32
    %c0_i32_12 = arith.constant 0 : i32
    %24 = arith.cmpi slt, %22, %c0_i32_12 : i32
    %c0_i32_13 = arith.constant 0 : i32
    %25 = arith.cmpi slt, %21, %c0_i32_13 : i32
    %26 = arith.xori %24, %25 : i1
    %27 = arith.andi %26, %23 : i1
    %28 = arith.addi %22, %21 : i32
    %29 = arith.select %27, %28, %22 : i32
    %c1_i32_14 = arith.constant 1 : i32
    %30 = arith.cmpi eq, %29, %c1_i32_14 : i32
    %31 = arith.extui %30 : i1 to i32
    %c0_i32_15 = arith.constant 0 : i32
    %32 = arith.cmpi ne, %31, %c0_i32_15 : i32
    scf.if %32 {
      %c0 = arith.constant 0 : index
      %c0_16 = arith.constant 0 : index
      %33 = vector.load %arg5[%c0, %c0_16] : memref<128x256xi8, #tpu.memory_space<vmem>>, vector<128x256xi8>
      %34 = arith.sitofp %33 : vector<128x256xi8> to vector<128x256xbf16>
      %c0_17 = arith.constant 0 : index
      %c0_18 = arith.constant 0 : index
      %35 = vector.load %arg8[%c0_17, %c0_18] : memref<256x128xbf16, #tpu.memory_space<vmem>>, vector<256x128xbf16>
      %cst = arith.constant dense<0.000000e+00> : vector<128x128xf32>
      %36 = tpu.matmul %34, %35, %cst {dimension_numbers = #tpu.dot_dimension_numbers<[1], [0], [0], [1], [0, 0, 1, 1], [], []>} : vector<128x256xbf16>, vector<256x128xbf16>, vector<128x128xf32> -> vector<128x128xf32>
      %37 = arith.truncf %36 : vector<128x128xf32> to vector<128x128xbf16>
      %c0_19 = arith.constant 0 : index
      %c0_20 = arith.constant 0 : index
      %38 = vector.load %arg4[%c0_19, %c0_20] : memref<128x128xbf16, #tpu.memory_space<vmem>>, vector<128x128xbf16>
      %cst_21 = arith.constant dense<0.000000e+00> : vector<128x128xf32>
      %39 = tpu.matmul %37, %38, %cst_21 {dimension_numbers = #tpu.dot_dimension_numbers<[1], [0], [0], [1], [0, 0, 1, 1], [], []>} : vector<128x128xbf16>, vector<128x128xbf16>, vector<128x128xf32> -> vector<128x128xf32>
      %40 = arith.index_cast %6 : i32 to index
      %c0_22 = arith.constant 0 : index
      %41 = vector.load %arg7[%40, %c0_22] : memref<256x128xf32, #tpu.memory_space<vmem>>, vector<128x128xf32>
      %42 = arith.addf %41, %39 : vector<128x128xf32>
      %cst_23 = arith.constant 0.000000e+00 : f32
      %43 = vector.broadcast %cst_23 : f32 to vector<128x128xf32>
      %44 = arith.maximumf %42, %43 : vector<128x128xf32>
      %45 = arith.truncf %44 : vector<128x128xf32> to vector<128x128xbf16>
      %46 = arith.index_cast %6 : i32 to index
      %c0_24 = arith.constant 0 : index
      %47 = vector.load %arg6[%46, %c0_24] : memref<256x128xbf16, #tpu.memory_space<vmem>>, vector<128x128xbf16>
      tpu.vector_store %arg6[%46, %c0_24], %45 {strides = array<i32>} : memref<256x128xbf16, #tpu.memory_space<vmem>>, vector<128x128xbf16>,
    } else {
    }
    return
  }
  func.func @transform_0(%arg0: i32, %arg1: i32) -> (i32, i32) {
    %c0_i32 = arith.constant 0 : i32
    %c0_i32_0 = arith.constant 0 : i32
    %c0_i32_1 = arith.constant 0 : i32
    return %c0_i32, %c0_i32_0 : i32, i32
  }
  func.func @transform_1(%arg0: i32, %arg1: i32) -> (i32, i32) {
    %c0_i32 = arith.constant 0 : i32
    %c0_i32_0 = arith.constant 0 : i32
    %c0_i32_1 = arith.constant 0 : i32
    return %c0_i32, %c0_i32_0 : i32, i32
  }
  func.func @transform_2(%arg0: i32, %arg1: i32) -> (i32, i32) {
    %c0_i32 = arith.constant 0 : i32
    %c0_i32_0 = arith.constant 0 : i32
    %c0_i32_1 = arith.constant 0 : i32
    return %c0_i32, %c0_i32_0 : i32, i32
  }
  func.func @transform_3(%arg0: i32, %arg1: i32) -> (i32, i32) {
    %c0_i32 = arith.constant 0 : i32
    %c0_i32_0 = arith.constant 0 : i32
    return %arg1, %c0_i32 : i32, i32
  }
  func.func @transform_4(%arg0: i32, %arg1: i32) -> (i32, i32) {
    %c0_i32 = arith.constant 0 : i32
    %c0_i32_0 = arith.constant 0 : i32
    %c0_i32_1 = arith.constant 0 : i32
    return %c0_i32, %c0_i32_0 : i32, i32
  }
}

</mosaic_0001>

<llo_original>
// kernel: tpu_custom_call.1
$region0: #{tpu_custom_call.1}
  #allocation0 [shape = 'u32[]', space=smem, size = 0x4, offset = 0x4, fixed_abs, tag = 'smem constant byte address 0x4 - core index']
  #allocation1 [shape = 'u32[144,128]{1,0:T(1,128)}', space=vmem, size = 0x12000, scoped, tag = 'internal scratch']
  #allocation2 [shape = 'f32[256,128]{1,0:T(8,128)}', space=vmem, size = 0x20000, scoped, tag = 'scratch operand']
  #allocation3 [shape = 'bf16[256,128]{1,0:T(16,128)(2,1)}', space=vmem, size = 0x10000, scoped, tag = 'scratch operand']
  %s0 = inlined_call_operand.vmem [shape: bf16[256,24], index: 0, kind: input, shape index: {}]
  %s1 = inlined_call_operand.vmem [shape: bf16[24,128], index: 1, kind: input, shape index: {}]
  %s2 = inlined_call_operand.hbm [shape: bf16[128,128], index: 2, kind: input, shape index: {}]
  %s3 = inlined_call_operand.vmem [shape: s8[256,256], index: 3, kind: input, shape index: {}]
  %s4 = inlined_call_operand.hbm [shape: bf16[256,128], index: 4, kind: output, shape index: {}]
  %s5 = sld [smem:[#allocation0]]
  $region65: #{tpu_custom_call.1} parent=0
    _
  %s7 = ssub.s32 1, %s5
  %s8 = scalar_select 0, %s7, %s5
  $region1: #{tpu_custom_call.1} parent=0
    #allocation4 [shape = 'u8[32768]{0}', space=vmem, size = 0x8000, scoped, tag = 'input window, operand 2, single buffered']
    #allocation5 [shape = 's32[2]{0}', space=sflag, size = 0x8, scoped, tag = 'scoped memory for tpu_custom_call.1']
    #allocation6 [shape = 's32[2]{0}', space=sflag, size = 0x8, scoped, tag = 'scoped memory for tpu_custom_call.1']
    #allocation7 [shape = 'u8[65536]{0}', space=vmem, size = 0x10000, scoped, tag = 'output window, operand 0, single buffered']
    %9 = vsyncpa [#allocation5], 0
    %10 = vsyncpa [#allocation6], 0
    loop: start=0, step=1, limit=6
    $region2: #{tpu_custom_call.1} parent=1 // loop_pre_header
      _
    $region3: #{tpu_custom_call.1} parent=1 // loop_header
      %s12 = sphi 0, %s16
      %p13 = scmp.ge.s32.totalorder %s12, 6
      %s19 = sphi 0, %s31
      %s20 = sphi 0, %s27
      %s21 = sphi 0, %s19
      %s22 = sphi 0, %s20
      %s23 = sphi 0, %s21
      %s24 = sphi 0, %s22
      %s32 = sphi 0, %s32
      %s34 = sphi 0, %s32
      %s35 = sphi 0, %s34
      %s49 = sphi 0, %s35
      %s53 = sphi 0, %s53
      %s55 = sphi 0, %s53
      %s56 = sphi 0, %s55
      %s70 = sphi 0, %s56
      %s74 = sphi 0, %s74
      %s76 = sphi 0, %s74
      %s77 = sphi 0, %s76
      %s91 = sphi 0, %s77
      %s97 = sphi 0, %s99
      %s100 = sphi 0, %s97
      %s101 = sphi 0, %s100
      %s117 = sphi 0, %s101
      %s121 = sphi 0, %s121
      %s123 = sphi 0, %s121
      %s124 = sphi 0, %s123
      %s138 = sphi 0, %s124
    $region4: #{tpu_custom_call.1} parent=1 // loop_header_branch
      %15 = sbr.rel (%p13) target = $region8
    $region5: #{tpu_custom_call.1} parent=1 // loop_body
      %s17 = ssub.s32 %s12, 1
      %s18 = ssub.s32 %s12, 2
      %s25 = sadd.s32 1, %s20
      %p26 = scmp.ge.s32.totalorder %s25, 2
      %s27 = scalar_select %p26, 0, %s25
      %s28 = sadd.s32 1, %s19
      %s29 = scalar_select %p26, %s28, %s19
      %p30 = scmp.ge.s32.totalorder %s29, 2
      %s31 = scalar_select %p30, 0, %s29
      %s33 = sadd.s32 %s32, 1
      %p36 = scmp.eq.s32.totalorder %s12, 3
      %p37 = scmp.ne.s32.totalorder %s32, %s34
      %p38 = scmp.eq.s32.totalorder %s12, 0
      %p39 = por %p37, %p38
      %p40 = scmp.ne.s32.totalorder %s32, %s34
      %p41 = scmp.eq.s32.totalorder %s17, 3
      %p42 = por %p40, %p41
      %p43 = scmp.ne.s32.totalorder %s34, %s35
      %p44 = scmp.eq.s32.totalorder %s17, 0
      %p45 = por %p43, %p44
      %p46 = scmp.ne.s32.totalorder %s34, %s35
      %p47 = scmp.eq.s32.totalorder %s18, 3
      %p48 = por %p46, %p47
      %p50 = scmp.ne.s32.totalorder %s35, %s49
      %p51 = scmp.eq.s32.totalorder %s18, 0
      %p52 = por %p50, %p51
      %s54 = sadd.s32 %s53, 1
      %p57 = scmp.eq.s32.totalorder %s12, 3
      %p58 = scmp.ne.s32.totalorder %s53, %s55
      %p59 = scmp.eq.s32.totalorder %s12, 0
      %p60 = por %p58, %p59
      %p61 = scmp.ne.s32.totalorder %s53, %s55
      %p62 = scmp.eq.s32.totalorder %s17, 3
      %p63 = por %p61, %p62
      %p64 = scmp.ne.s32.totalorder %s55, %s56
      %p65 = scmp.eq.s32.totalorder %s17, 0
      %p66 = por %p64, %p65
      %p67 = scmp.ne.s32.totalorder %s55, %s56
      %p68 = scmp.eq.s32.totalorder %s18, 3
      %p69 = por %p67, %p68
      %p71 = scmp.ne.s32.totalorder %s56, %s70
      %p72 = scmp.eq.s32.totalorder %s18, 0
      %p73 = por %p71, %p72
      %s75 = sadd.s32 %s74, 1
      %p78 = scmp.eq.s32.totalorder %s12, 3
      %p79 = scmp.ne.s32.totalorder %s74, %s76
      %p80 = scmp.eq.s32.totalorder %s12, 0
      %p81 = por %p79, %p80
      %p82 = scmp.ne.s32.totalorder %s74, %s76
      %p83 = scmp.eq.s32.totalorder %s17, 3
      %p84 = por %p82, %p83
      %p85 = scmp.ne.s32.totalorder %s76, %s77
      %p86 = scmp.eq.s32.totalorder %s17, 0
      %p87 = por %p85, %p86
      %p88 = scmp.ne.s32.totalorder %s76, %s77
      %p89 = scmp.eq.s32.totalorder %s18, 3
      %p90 = por %p88, %p89
      %p92 = scmp.ne.s32.totalorder %s77, %s91
      %p93 = scmp.eq.s32.totalorder %s18, 0
      %p94 = por %p92, %p93
      %s95 = ssub.s32 %s20, %s27
      %p96 = scmp.eq.s32.totalorder %s95, 0
      %s98 = sadd.s32 %s97, 1
      %s99 = scalar_select %p96, %s97, %s98
      %p102 = pneg %p96
      %p103 = scmp.eq.s32.totalorder %s12, 3
      %p104 = por %p102, %p103
      %p105 = scmp.ne.s32.totalorder %s97, %s100
      %p106 = scmp.eq.s32.totalorder %s12, 0
      %p107 = por %p105, %p106
      %p108 = scmp.ne.s32.totalorder %s97, %s100
      %p109 = scmp.eq.s32.totalorder %s17, 3
      %p110 = por %p108, %p109
      %p111 = scmp.ne.s32.totalorder %s100, %s101
      %p112 = scmp.eq.s32.totalorder %s17, 0
      %p113 = por %p111, %p112
      %p114 = scmp.ne.s32.totalorder %s100, %s101
      %p115 = scmp.eq.s32.totalorder %s18, 3
      %p116 = por %p114, %p115
      %p118 = scmp.ne.s32.totalorder %s101, %s117
      %p119 = scmp.eq.s32.totalorder %s18, 0
      %p120 = por %p118, %p119
      %s122 = sadd.s32 %s121, 1
      %p125 = scmp.eq.s32.totalorder %s12, 3
      %p126 = scmp.ne.s32.totalorder %s121, %s123
      %p127 = scmp.eq.s32.totalorder %s12, 0
      %p128 = por %p126, %p127
      %p129 = scmp.ne.s32.totalorder %s121, %s123
      %p130 = scmp.eq.s32.totalorder %s17, 3
      %p131 = por %p129, %p130
      %p132 = scmp.ne.s32.totalorder %s123, %s124
      %p133 = scmp.eq.s32.totalorder %s17, 0
      %p134 = por %p132, %p133
      %p135 = scmp.ne.s32.totalorder %s123, %s124
      %p136 = scmp.eq.s32.totalorder %s18, 3
      %p137 = por %p135, %p136
      %p139 = scmp.ne.s32.totalorder %s124, %s138
      %p140 = scmp.eq.s32.totalorder %s18, 0
      %p141 = por %p139, %p140
      %p142 = scmp.le.s32.totalorder 1, %s12
      %p143 = scmp.lt.s32.totalorder %s12, 5
      %p144 = pnand %p142, %p143
      %p145 = pneg %p144
      // Predicated region
      $region9: #{tpu_custom_call.1} parent=5 // pred_check
        _
      $region10: #{tpu_custom_call.1} parent=5 // pred_check_branch
        %147 = sbr.rel (%p144) target = $region12
      $region11: #{tpu_custom_call.1} parent=5 // pred_region
        %s148 = ssub.s32 %s12, 1
        // Predicated region
        $region13: #{tpu_custom_call.1} parent=11 // pred_check
          %p149 = pneg %p45
        $region14: #{tpu_custom_call.1} parent=11 // pred_check_branch
          %151 = sbr.rel (%p149) target = $region16
        $region15: #{tpu_custom_call.1} parent=11 // pred_region
          _
        $region16: #{tpu_custom_call.1} parent=11 // pred_fallthru
          _
        // Predicated region
        $region17: #{tpu_custom_call.1} parent=11 // pred_check
          %p152 = pneg %p66
        $region18: #{tpu_custom_call.1} parent=11 // pred_check_branch
          %154 = sbr.rel (%p152) target = $region20
        $region19: #{tpu_custom_call.1} parent=11 // pred_region
          _
        $region20: #{tpu_custom_call.1} parent=11 // pred_fallthru
          _
        // Predicated region
        $region21: #{tpu_custom_call.1} parent=11 // pred_check
          %p155 = pneg %p87
        $region22: #{tpu_custom_call.1} parent=11 // pred_check_branch
          %157 = sbr.rel (%p155) target = $region24
        $region23: #{tpu_custom_call.1} parent=11 // pred_region
          %s159 = ssub.s32 1024, 1024
          %160 = vsyncadd [#allocation5], %s159
          %s161 = sshll.u32 [#allocation4], 4
          %s162 = int_to_ptr.vmem [resolvable:$true] %s161
          %167 = dma.hbm_to_vmem [thread:$0]  %s2, 1024, %s162, [#allocation5], 64, 64, 4
        $region24: #{tpu_custom_call.1} parent=11 // pred_fallthru
          _
      $region12: #{tpu_custom_call.1} parent=5 // pred_fallthru
        _
      %p168 = scmp.lt.s32.totalorder %s12, 4
      // Predicated region
      $region25: #{tpu_custom_call.1} parent=5 // pred_check
        %p169 = pneg %p168
      $region26: #{tpu_custom_call.1} parent=5 // pred_check_branch
        %171 = sbr.rel (%p169) target = $region28
      $region27: #{tpu_custom_call.1} parent=5 // pred_region
        // Predicated region
        $region29: #{tpu_custom_call.1} parent=27 // pred_check
          %p172 = pneg %p107
        $region30: #{tpu_custom_call.1} parent=27 // pred_check_branch
          %174 = sbr.rel (%p172) target = $region32
        $region31: #{tpu_custom_call.1} parent=27 // pred_region
          %s175 = smul.u32 4, %s20
          %p176 = scmp.lt.s32.totalorder %s175, 7
          %s177 = scalar_select %p176, %s175, 7
          %s178 = smul.addr %s177, 2
          %s179 = smul.addr %s178, 8
          %s180 = scalar_lea.vmem %s3, %s179
          %s181 = smul.u32 4, %s20
        $region32: #{tpu_custom_call.1} parent=27 // pred_fallthru
          _
      $region28: #{tpu_custom_call.1} parent=5 // pred_fallthru
        _
      %p182 = scmp.le.s32.totalorder 1, %s12
      %p183 = scmp.lt.s32.totalorder %s12, 5
      %p184 = pnand %p182, %p183
      %p185 = pneg %p184
      // Predicated region
      $region33: #{tpu_custom_call.1} parent=5 // pred_check
        _
      $region34: #{tpu_custom_call.1} parent=5 // pred_check_branch
        %187 = sbr.rel (%p184) target = $region36
      $region35: #{tpu_custom_call.1} parent=5 // pred_region
        %s188 = ssub.s32 %s12, 1
        // Predicated region
        $region37: #{tpu_custom_call.1} parent=35 // pred_check
          %p189 = pneg %p87
        $region38: #{tpu_custom_call.1} parent=35 // pred_check_branch
          %191 = sbr.rel (%p189) target = $region40
        $region39: #{tpu_custom_call.1} parent=35 // pred_region
          %192 = dma.done [#allocation5], 1024
        $region40: #{tpu_custom_call.1} parent=35 // pred_fallthru
          _
        %p193 = pneg %p45
        %p194 = pneg %p42
        %p195 = pneg %p66
        %p196 = pneg %p63
        %p197 = pneg %p87
        %p198 = pneg %p84
        %s199 = smul.u32 4, %s22
        %p200 = scmp.lt.s32.totalorder %s199, 7
        %s201 = scalar_select %p200, %s199, 7
        %s202 = smul.addr %s201, 2
        %s203 = smul.addr %s202, 8
        %s204 = scalar_lea.vmem %s3, %s203
        %p205 = pneg %p113
        %p206 = pneg %p110
        %p207 = pneg %p134
        %p208 = pneg %p131
        %s209 = smul.u32 4, %s22
        %p210 = scmp.lt.s32.totalorder %s209, 7
        %s211 = scalar_select %p210, %s209, 7
        %s212 = smul.addr %s211, 2
        %s213 = smul.addr %s212, 8
        %s214 = scalar_lea.vmem %s3, %s213
        %s215 = smul.u32 4, %s22
        %p217 = scmp.eq.s32.totalorder %s21, 0
        %p218 = scmp.eq.s32.totalorder %s22, 0
        %p219 = pnand %p217, %p218
        %p220 = pneg %p219
        // Predicated region
        $region41: #{tpu_custom_call.1} parent=35 // pred_check
          _
        $region42: #{tpu_custom_call.1} parent=35 // pred_check_branch
          %222 = sbr.rel (%p219) target = $region44
        $region43: #{tpu_custom_call.1} parent=35 // pred_region
          %v223 = vld [vmem:[%s0] sm:$0xf]
          %v224 = vld [vmem:[%s0 + $0x4] sm:$0xf]
          %v225 = vld [vmem:[%s0 + $0x8] sm:$0xf]
          %v226 = vld [vmem:[%s0 + $0xc] sm:$0xf]
          %v227 = vld [vmem:[%s0 + $0x10] sm:$0xf]
          %v228 = vld [vmem:[%s0 + $0x14] sm:$0xf]
          %v229 = vld [vmem:[%s0 + $0x18] sm:$0xf]
          %v230 = vld [vmem:[%s0 + $0x1c] sm:$0xf]
          %v231 = vld [vmem:[%s0 + $0x20] sm:$0xf]
          %v232 = vld [vmem:[%s0 + $0x24] sm:$0xf]
          %v233 = vld [vmem:[%s0 + $0x28] sm:$0xf]
          %v234 = vld [vmem:[%s0 + $0x2c] sm:$0xf]
          %v235 = vld [vmem:[%s0 + $0x30] sm:$0xf]
          %v236 = vld [vmem:[%s0 + $0x34] sm:$0xf]
          %v237 = vld [vmem:[%s0 + $0x38] sm:$0xf]
          %v238 = vld [vmem:[%s0 + $0x3c] sm:$0xf]
          %v239 = vld [vmem:[%s0 + $0x40] sm:$0xf]
          %v240 = vld [vmem:[%s0 + $0x44] sm:$0xf]
          %v241 = vld [vmem:[%s0 + $0x48] sm:$0xf]
          %v242 = vld [vmem:[%s0 + $0x4c] sm:$0xf]
          %v243 = vld [vmem:[%s0 + $0x50] sm:$0xf]
          %v244 = vld [vmem:[%s0 + $0x54] sm:$0xf]
          %v245 = vld [vmem:[%s0 + $0x58] sm:$0xf]
          %v246 = vld [vmem:[%s0 + $0x5c] sm:$0xf]
          %v247 = vld [vmem:[%s0 + $0x60] sm:$0xf]
          %v248 = vld [vmem:[%s0 + $0x64] sm:$0xf]
          %v249 = vld [vmem:[%s0 + $0x68] sm:$0xf]
          %v250 = vld [vmem:[%s0 + $0x6c] sm:$0xf]
          %v251 = vld [vmem:[%s0 + $0x70] sm:$0xf]
          %v252 = vld [vmem:[%s0 + $0x74] sm:$0xf]
          %v253 = vld [vmem:[%s0 + $0x78] sm:$0xf]
          %v254 = vld [vmem:[%s0 + $0x7c] sm:$0xf]
          %v255 = vld [vmem:[%s1] sm:$0xf]
          %v256 = vld [vmem:[%s1 + $0x4] sm:$0xf]
          %v257 = vld [vmem:[%s1 + $0x8] sm:$0xf]
          %v290 = vunpack.c.l.b16 %v223
          %v291 = vunpack.c.l.b16 %v224
          %v292 = vunpack.c.l.b16 %v225
          %v293 = vunpack.c.l.b16 %v226
          %v294 = vunpack.c.l.b16 %v227
          %v295 = vunpack.c.l.b16 %v228
          %v296 = vunpack.c.l.b16 %v229
          %v297 = vunpack.c.l.b16 %v230
          %v298 = vunpack.c.l.b16 %v231
          %v299 = vunpack.c.l.b16 %v232
          %v300 = vunpack.c.l.b16 %v233
          %v301 = vunpack.c.l.b16 %v234
          %v302 = vunpack.c.l.b16 %v235
          %v303 = vunpack.c.l.b16 %v236
          %v304 = vunpack.c.l.b16 %v237
          %v305 = vunpack.c.l.b16 %v238
          %v306 = vunpack.c.l.b16 %v239
          %v307 = vunpack.c.l.b16 %v240
          %v308 = vunpack.c.l.b16 %v241
          %v309 = vunpack.c.l.b16 %v242
          %v310 = vunpack.c.l.b16 %v243
          %v311 = vunpack.c.l.b16 %v244
          %v312 = vunpack.c.l.b16 %v245
          %v313 = vunpack.c.l.b16 %v246
          %v314 = vunpack.c.l.b16 %v247
          %v315 = vunpack.c.l.b16 %v248
          %v316 = vunpack.c.l.b16 %v249
          %v317 = vunpack.c.l.b16 %v250
          %v318 = vunpack.c.l.b16 %v251
          %v319 = vunpack.c.l.b16 %v252
          %v320 = vunpack.c.l.b16 %v253
          %v321 = vunpack.c.l.b16 %v254
          %v322 = vpack.c.b16 %v291, %v290
          %v323 = vpack.c.b16 %v293, %v292
          %v324 = vpack.c.b16 %v295, %v294
          %v325 = vpack.c.b16 %v297, %v296
          %v326 = vpack.c.b16 %v299, %v298
          %v327 = vpack.c.b16 %v301, %v300
          %v328 = vpack.c.b16 %v303, %v302
          %v329 = vpack.c.b16 %v305, %v304
          %v330 = vpack.c.b16 %v307, %v306
          %v331 = vpack.c.b16 %v309, %v308
          %v332 = vpack.c.b16 %v311, %v310
          %v333 = vpack.c.b16 %v313, %v312
          %v334 = vpack.c.b16 %v315, %v314
          %v335 = vpack.c.b16 %v317, %v316
          %v336 = vpack.c.b16 %v319, %v318
          %v337 = vpack.c.b16 %v321, %v320
          %v341 = vunpack.c.l.b16 %v255
          %v342 = vunpack.c.l.b16 %v256
          %v343 = vunpack.c.l.b16 %v257
          %v344 = vpack.c.b16 %v342, %v341
          %v345 = vpack.c.b16 %v343, %v343
          %vm347 = vcmask 195584
          %v349 = vsel %vm347, %v322, 0
          %v352 = vsel %vm347, %v323, 0
          %v355 = vsel %vm347, %v324, 0
          %v358 = vsel %vm347, %v325, 0
          %v361 = vsel %vm347, %v326, 0
          %v364 = vsel %vm347, %v327, 0
          %v367 = vsel %vm347, %v328, 0
          %v370 = vsel %vm347, %v329, 0
          %v373 = vsel %vm347, %v330, 0
          %v376 = vsel %vm347, %v331, 0
          %v379 = vsel %vm347, %v332, 0
          %v382 = vsel %vm347, %v333, 0
          %v385 = vsel %vm347, %v334, 0
          %v388 = vsel %vm347, %v335, 0
          %v391 = vsel %vm347, %v336, 0
          %v394 = vsel %vm347, %v337, 0
          %vm396 = vcmask 1043456
          %v398 = vsel %vm396, %v345, 0
          %400 = vmatprep.subr.bf16.mxu0 0
          %401 = vmatpush1.bf16.msra.mxu0 %v344
          %402 = vmatprep.subr.bf16.mxu0 0
          %403 = vmatpush1.bf16.msra.mxu0 %v398
          %404 = vmatprep.subr.bf16.mxu0 0
          %405 = vmatpush1.bf16.msra.mxu0 0
          %406 = vmatprep.subr.bf16.mxu0 0
          %407 = vmatpush1.bf16.msra.mxu0 0
          %408 = vmatprep.subr.bf16.mxu0 0
          %409 = vmatpush1.bf16.msra.mxu0 0
          %410 = vmatprep.subr.bf16.mxu0 0
          %411 = vmatpush1.bf16.msra.mxu0 0
          %412 = vmatprep.subr.bf16.mxu0 0
          %413 = vmatpush1.bf16.msra.mxu0 0
          %414 = vmatprep.subr.bf16.mxu0 0
          %415 = vmatpush1.bf16.msra.mxu0 0
          %416 = vmatprep.subr.bf16.mxu0 0
          %417 = vmatpush1.bf16.msra.mxu0 0
          %418 = vmatprep.subr.bf16.mxu0 0
          %419 = vmatpush1.bf16.msra.mxu0 0
          %420 = vmatprep.subr.bf16.mxu0 0
          %421 = vmatpush1.bf16.msra.mxu0 0
          %422 = vmatprep.subr.bf16.mxu0 0
          %423 = vmatpush1.bf16.msra.mxu0 0
          %424 = vmatprep.subr.bf16.mxu0 0
          %425 = vmatpush1.bf16.msra.mxu0 0
          %426 = vmatprep.subr.bf16.mxu0 0
          %427 = vmatpush1.bf16.msra.mxu0 0
          %428 = vmatprep.subr.bf16.mxu0 0
          %429 = vmatpush1.bf16.msra.mxu0 0
          %430 = vmatprep.subr.bf16.mxu0 0
          %431 = vmatpush1.bf16.msra.mxu0 0
          %432 = vmatprep.mubr.bf16.mxu0 0
          %433 = vmatmul.mubr.bf16.gmra.mrb[0].mxu0 %v349
          %v434 = vpop.f32.mrb[0].mxu0
          %v435 = vadd.f32 0.0, %v434
          %v436 = vpop.f32.mrb[0].mxu0
          %v437 = vpop.f32.mrb[0].mxu0
          %v438 = vadd.f32 0.0, %v437
          %v439 = vpop.f32.mrb[0].mxu0
          %440 = vmatprep.mubr.bf16.mxu0 0
          %441 = vmatmul.mubr.bf16.gmra.mrb[0].mxu0 %v352
          %v442 = vpop.f32.mrb[0].mxu0
          %v443 = vadd.f32 0.0, %v442
          %v444 = vpop.f32.mrb[0].mxu0
          %v445 = vpop.f32.mrb[0].mxu0
          %v446 = vadd.f32 0.0, %v445
          %v447 = vpop.f32.mrb[0].mxu0
          %448 = vmatprep.mubr.bf16.mxu0 0
          %449 = vmatmul.mubr.bf16.gmra.mrb[0].mxu0 %v355
          %v450 = vpop.f32.mrb[0].mxu0
          %v451 = vadd.f32 0.0, %v450
          %v452 = vpop.f32.mrb[0].mxu0
          %v453 = vpop.f32.mrb[0].mxu0
          %v454 = vadd.f32 0.0, %v453
          %v455 = vpop.f32.mrb[0].mxu0
          %456 = vmatprep.mubr.bf16.mxu0 0
          %457 = vmatmul.mubr.bf16.gmra.mrb[0].mxu0 %v358
          %v458 = vpop.f32.mrb[0].mxu0
          %v459 = vadd.f32 0.0, %v458
          %v460 = vpop.f32.mrb[0].mxu0
          %v461 = vpop.f32.mrb[0].mxu0
          %v462 = vadd.f32 0.0, %v461
          %v463 = vpop.f32.mrb[0].mxu0
          %464 = vmatprep.mubr.bf16.mxu0 0
          %465 = vmatmul.mubr.bf16.gmra.mrb[0].mxu0 %v361
          %v466 = vpop.f32.mrb[0].mxu0
          %v467 = vadd.f32 0.0, %v466
          %v468 = vpop.f32.mrb[0].mxu0
          %v469 = vpop.f32.mrb[0].mxu0
          %v470 = vadd.f32 0.0, %v469
          %v471 = vpop.f32.mrb[0].mxu0
          %472 = vmatprep.mubr.bf16.mxu0 0
          %473 = vmatmul.mubr.bf16.gmra.mrb[0].mxu0 %v364
          %v474 = vpop.f32.mrb[0].mxu0
          %v475 = vadd.f32 0.0, %v474
          %v476 = vpop.f32.mrb[0].mxu0
          %v477 = vpop.f32.mrb[0].mxu0
          %v478 = vadd.f32 0.0, %v477
          %v479 = vpop.f32.mrb[0].mxu0
          %480 = vmatprep.mubr.bf16.mxu0 0
          %481 = vmatmul.mubr.bf16.gmra.mrb[0].mxu0 %v367
          %v482 = vpop.f32.mrb[0].mxu0
          %v483 = vadd.f32 0.0, %v482
          %v484 = vpop.f32.mrb[0].mxu0
          %v485 = vpop.f32.mrb[0].mxu0
          %v486 = vadd.f32 0.0, %v485
          %v487 = vpop.f32.mrb[0].mxu0
          %488 = vmatprep.mubr.bf16.mxu0 0
          %489 = vmatmul.mubr.bf16.gmra.mrb[0].mxu0 %v370
          %v490 = vpop.f32.mrb[0].mxu0
          %v491 = vadd.f32 0.0, %v490
          %v492 = vpop.f32.mrb[0].mxu0
          %v493 = vpop.f32.mrb[0].mxu0
          %v494 = vadd.f32 0.0, %v493
          %v495 = vpop.f32.mrb[0].mxu0
          %496 = vmatprep.mubr.bf16.mxu0 0
          %497 = vmatmul.mubr.bf16.gmra.mrb[0].mxu0 %v373
          %v498 = vpop.f32.mrb[0].mxu0
          %v499 = vadd.f32 0.0, %v498
          %v500 = vpop.f32.mrb[0].mxu0
          %v501 = vpop.f32.mrb[0].mxu0
          %v502 = vadd.f32 0.0, %v501
          %v503 = vpop.f32.mrb[0].mxu0
          %504 = vmatprep.mubr.bf16.mxu0 0
          %505 = vmatmul.mubr.bf16.gmra.mrb[0].mxu0 %v376
          %v506 = vpop.f32.mrb[0].mxu0
          %v507 = vadd.f32 0.0, %v506
          %v508 = vpop.f32.mrb[0].mxu0
          %v509 = vpop.f32.mrb[0].mxu0
          %v510 = vadd.f32 0.0, %v509
          %v511 = vpop.f32.mrb[0].mxu0
          %512 = vmatprep.mubr.bf16.mxu0 0
          %513 = vmatmul.mubr.bf16.gmra.mrb[0].mxu0 %v379
          %v514 = vpop.f32.mrb[0].mxu0
          %v515 = vadd.f32 0.0, %v514
          %v516 = vpop.f32.mrb[0].mxu0
          %v517 = vpop.f32.mrb[0].mxu0
          %v518 = vadd.f32 0.0, %v517
          %v519 = vpop.f32.mrb[0].mxu0
          %520 = vmatprep.mubr.bf16.mxu0 0
          %521 = vmatmul.mubr.bf16.gmra.mrb[0].mxu0 %v382
          %v522 = vpop.f32.mrb[0].mxu0
          %v523 = vadd.f32 0.0, %v522
          %v524 = vpop.f32.mrb[0].mxu0
          %v525 = vpop.f32.mrb[0].mxu0
          %v526 = vadd.f32 0.0, %v525
          %v527 = vpop.f32.mrb[0].mxu0
          %528 = vmatprep.mubr.bf16.mxu0 0
          %529 = vmatmul.mubr.bf16.gmra.mrb[0].mxu0 %v385
          %v530 = vpop.f32.mrb[0].mxu0
          %v531 = vadd.f32 0.0, %v530
          %v532 = vpop.f32.mrb[0].mxu0
          %v533 = vpop.f32.mrb[0].mxu0
          %v534 = vadd.f32 0.0, %v533
          %v535 = vpop.f32.mrb[0].mxu0
          %536 = vmatprep.mubr.bf16.mxu0 0
          %537 = vmatmul.mubr.bf16.gmra.mrb[0].mxu0 %v388
          %v538 = vpop.f32.mrb[0].mxu0
          %v539 = vadd.f32 0.0, %v538
          %v540 = vpop.f32.mrb[0].mxu0
          %v541 = vpop.f32.mrb[0].mxu0
          %v542 = vadd.f32 0.0, %v541
          %v543 = vpop.f32.mrb[0].mxu0
          %544 = vmatprep.mubr.bf16.mxu0 0
          %545 = vmatmul.mubr.bf16.gmra.mrb[0].mxu0 %v391
          %v546 = vpop.f32.mrb[0].mxu0
          %v547 = vadd.f32 0.0, %v546
          %v548 = vpop.f32.mrb[0].mxu0
          %v549 = vpop.f32.mrb[0].mxu0
          %v550 = vadd.f32 0.0, %v549
          %v551 = vpop.f32.mrb[0].mxu0
          %552 = vmatprep.mubr.bf16.mxu0 0
          %553 = vmatmul.mubr.bf16.gmra.mrb[0].mxu0 %v394
          %v554 = vpop.f32.mrb[0].mxu0
          %v555 = vadd.f32 0.0, %v554
          %v556 = vpop.f32.mrb[0].mxu0
          %v557 = vpop.f32.mrb[0].mxu0
          %v558 = vadd.f32 0.0, %v557
          %v559 = vpop.f32.mrb[0].mxu0
          %560 = vdwg.mxu0
          %561 = vst [vmem:[#allocation2] sm:$0xff] %v435
          %562 = vst [vmem:[#allocation2 + $0x8] sm:$0xff] %v438
          %563 = vst [vmem:[#allocation2 + $0x10] sm:$0xff] %v443
          %564 = vst [vmem:[#allocation2 + $0x18] sm:$0xff] %v446
          %565 = vst [vmem:[#allocation2 + $0x20] sm:$0xff] %v451
          %566 = vst [vmem:[#allocation2 + $0x28] sm:$0xff] %v454
          %567 = vst [vmem:[#allocation2 + $0x30] sm:$0xff] %v459
          %568 = vst [vmem:[#allocation2 + $0x38] sm:$0xff] %v462
          %569 = vst [vmem:[#allocation2 + $0x40] sm:$0xff] %v467
          %570 = vst [vmem:[#allocation2 + $0x48] sm:$0xff] %v470
          %571 = vst [vmem:[#allocation2 + $0x50] sm:$0xff] %v475
          %572 = vst [vmem:[#allocation2 + $0x58] sm:$0xff] %v478
          %573 = vst [vmem:[#allocation2 + $0x60] sm:$0xff] %v483
          %574 = vst [vmem:[#allocation2 + $0x68] sm:$0xff] %v486
          %575 = vst [vmem:[#allocation2 + $0x70] sm:$0xff] %v491
          %576 = vst [vmem:[#allocation2 + $0x78] sm:$0xff] %v494
          %577 = vst [vmem:[#allocation2 + $0x80] sm:$0xff] %v499
          %578 = vst [vmem:[#allocation2 + $0x88] sm:$0xff] %v502
          %579 = vst [vmem:[#allocation2 + $0x90] sm:$0xff] %v507
          %580 = vst [vmem:[#allocation2 + $0x98] sm:$0xff] %v510
          %581 = vst [vmem:[#allocation2 + $0xa0] sm:$0xff] %v515
          %582 = vst [vmem:[#allocation2 + $0xa8] sm:$0xff] %v518
          %583 = vst [vmem:[#allocation2 + $0xb0] sm:$0xff] %v523
          %584 = vst [vmem:[#allocation2 + $0xb8] sm:$0xff] %v526
          %585 = vst [vmem:[#allocation2 + $0xc0] sm:$0xff] %v531
          %586 = vst [vmem:[#allocation2 + $0xc8] sm:$0xff] %v534
          %587 = vst [vmem:[#allocation2 + $0xd0] sm:$0xff] %v539
          %588 = vst [vmem:[#allocation2 + $0xd8] sm:$0xff] %v542
          %589 = vst [vmem:[#allocation2 + $0xe0] sm:$0xff] %v547
          %590 = vst [vmem:[#allocation2 + $0xe8] sm:$0xff] %v550
          %591 = vst [vmem:[#allocation2 + $0xf0] sm:$0xff] %v555
          %592 = vst [vmem:[#allocation2 + $0xf8] sm:$0xff] %v558
          %v593 = vmax.f32 %v435, 0.0
          %v594 = vmax.f32 %v438, 0.0
          %v595 = vmax.f32 %v443, 0.0
          %v596 = vmax.f32 %v446, 0.0
          %v597 = vmax.f32 %v451, 0.0
          %v598 = vmax.f32 %v454, 0.0
          %v599 = vmax.f32 %v459, 0.0
          %v600 = vmax.f32 %v462, 0.0
          %v601 = vmax.f32 %v467, 0.0
          %v602 = vmax.f32 %v470, 0.0
          %v603 = vmax.f32 %v475, 0.0
          %v604 = vmax.f32 %v478, 0.0
          %v605 = vmax.f32 %v483, 0.0
          %v606 = vmax.f32 %v486, 0.0
          %v607 = vmax.f32 %v491, 0.0
          %v608 = vmax.f32 %v494, 0.0
          %v609 = vmax.f32 %v499, 0.0
          %v610 = vmax.f32 %v502, 0.0
          %v611 = vmax.f32 %v507, 0.0
          %v612 = vmax.f32 %v510, 0.0
          %v613 = vmax.f32 %v515, 0.0
          %v614 = vmax.f32 %v518, 0.0
          %v615 = vmax.f32 %v523, 0.0
          %v616 = vmax.f32 %v526, 0.0
          %v617 = vmax.f32 %v531, 0.0
          %v618 = vmax.f32 %v534, 0.0
          %v619 = vmax.f32 %v539, 0.0
          %v620 = vmax.f32 %v542, 0.0
          %v621 = vmax.f32 %v547, 0.0
          %v622 = vmax.f32 %v550, 0.0
          %v623 = vmax.f32 %v555, 0.0
          %v624 = vmax.f32 %v558, 0.0
          %v625 = vpack.c.bf16 %v594, %v593
          %v626 = vpack.c.bf16 %v596, %v595
          %v627 = vpack.c.bf16 %v598, %v597
          %v628 = vpack.c.bf16 %v600, %v599
          %v629 = vpack.c.bf16 %v602, %v601
          %v630 = vpack.c.bf16 %v604, %v603
          %v631 = vpack.c.bf16 %v606, %v605
          %v632 = vpack.c.bf16 %v608, %v607
          %v633 = vpack.c.bf16 %v610, %v609
          %v634 = vpack.c.bf16 %v612, %v611
          %v635 = vpack.c.bf16 %v614, %v613
          %v636 = vpack.c.bf16 %v616, %v615
          %v637 = vpack.c.bf16 %v618, %v617
          %v638 = vpack.c.bf16 %v620, %v619
          %v639 = vpack.c.bf16 %v622, %v621
          %v640 = vpack.c.bf16 %v624, %v623
          %v657 = vunpack.c.l.b16 %v625
          %v658 = vunpack.c.h.b16 %v625
          %v659 = vunpack.c.l.b16 %v626
          %v660 = vunpack.c.h.b16 %v626
          %v661 = vunpack.c.l.b16 %v627
          %v662 = vunpack.c.h.b16 %v627
          %v663 = vunpack.c.l.b16 %v628
          %v664 = vunpack.c.h.b16 %v628
          %v665 = vunpack.c.l.b16 %v629
          %v666 = vunpack.c.h.b16 %v629
          %v667 = vunpack.c.l.b16 %v630
          %v668 = vunpack.c.h.b16 %v630
          %v669 = vunpack.c.l.b16 %v631
          %v670 = vunpack.c.h.b16 %v631
          %v671 = vunpack.c.l.b16 %v632
          %v672 = vunpack.c.h.b16 %v632
          %v673 = vunpack.c.l.b16 %v633
          %v674 = vunpack.c.h.b16 %v633
          %v675 = vunpack.c.l.b16 %v634
          %v676 = vunpack.c.h.b16 %v634
          %v677 = vunpack.c.l.b16 %v635
          %v678 = vunpack.c.h.b16 %v635
          %v679 = vunpack.c.l.b16 %v636
          %v680 = vunpack.c.h.b16 %v636
          %v681 = vunpack.c.l.b16 %v637
          %v682 = vunpack.c.h.b16 %v637
          %v683 = vunpack.c.l.b16 %v638
          %v684 = vunpack.c.h.b16 %v638
          %v685 = vunpack.c.l.b16 %v639
          %v686 = vunpack.c.h.b16 %v639
          %v687 = vunpack.c.l.b16 %v640
          %v688 = vunpack.c.h.b16 %v640
          %v689 = vpack.c.b16 %v657, %v657
          %v690 = vpack.c.b16 %v658, %v658
          %v691 = vpack.c.b16 %v659, %v659
          %v692 = vpack.c.b16 %v660, %v660
          %v693 = vpack.c.b16 %v661, %v661
          %v694 = vpack.c.b16 %v662, %v662
          %v695 = vpack.c.b16 %v663, %v663
          %v696 = vpack.c.b16 %v664, %v664
          %v697 = vpack.c.b16 %v665, %v665
          %v698 = vpack.c.b16 %v666, %v666
          %v699 = vpack.c.b16 %v667, %v667
          %v700 = vpack.c.b16 %v668, %v668
          %v701 = vpack.c.b16 %v669, %v669
          %v702 = vpack.c.b16 %v670, %v670
          %v703 = vpack.c.b16 %v671, %v671
          %v704 = vpack.c.b16 %v672, %v672
          %v705 = vpack.c.b16 %v673, %v673
          %v706 = vpack.c.b16 %v674, %v674
          %v707 = vpack.c.b16 %v675, %v675
          %v708 = vpack.c.b16 %v676, %v676
          %v709 = vpack.c.b16 %v677, %v677
          %v710 = vpack.c.b16 %v678, %v678
          %v711 = vpack.c.b16 %v679, %v679
          %v712 = vpack.c.b16 %v680, %v680
          %v713 = vpack.c.b16 %v681, %v681
          %v714 = vpack.c.b16 %v682, %v682
          %v715 = vpack.c.b16 %v683, %v683
          %v716 = vpack.c.b16 %v684, %v684
          %v717 = vpack.c.b16 %v685, %v685
          %v718 = vpack.c.b16 %v686, %v686
          %v719 = vpack.c.b16 %v687, %v687
          %v720 = vpack.c.b16 %v688, %v688
          %753 = vst [vmem:[#allocation7] sm:$0xf] %v689
          %754 = vst [vmem:[#allocation7 + $0x4] sm:$0xf] %v690
          %755 = vst [vmem:[#allocation7 + $0x8] sm:$0xf] %v691
          %756 = vst [vmem:[#allocation7 + $0xc] sm:$0xf] %v692
          %757 = vst [vmem:[#allocation7 + $0x10] sm:$0xf] %v693
          %758 = vst [vmem:[#allocation7 + $0x14] sm:$0xf] %v694
          %759 = vst [vmem:[#allocation7 + $0x18] sm:$0xf] %v695
          %760 = vst [vmem:[#allocation7 + $0x1c] sm:$0xf] %v696
          %761 = vst [vmem:[#allocation7 + $0x20] sm:$0xf] %v697
          %762 = vst [vmem:[#allocation7 + $0x24] sm:$0xf] %v698
          %763 = vst [vmem:[#allocation7 + $0x28] sm:$0xf] %v699
          %764 = vst [vmem:[#allocation7 + $0x2c] sm:$0xf] %v700
          %765 = vst [vmem:[#allocation7 + $0x30] sm:$0xf] %v701
          %766 = vst [vmem:[#allocation7 + $0x34] sm:$0xf] %v702
          %767 = vst [vmem:[#allocation7 + $0x38] sm:$0xf] %v703
          %768 = vst [vmem:[#allocation7 + $0x3c] sm:$0xf] %v704
          %769 = vst [vmem:[#allocation7 + $0x40] sm:$0xf] %v705
          %770 = vst [vmem:[#allocation7 + $0x44] sm:$0xf] %v706
          %771 = vst [vmem:[#allocation7 + $0x48] sm:$0xf] %v707
          %772 = vst [vmem:[#allocation7 + $0x4c] sm:$0xf] %v708
          %773 = vst [vmem:[#allocation7 + $0x50] sm:$0xf] %v709
          %774 = vst [vmem:[#allocation7 + $0x54] sm:$0xf] %v710
          %775 = vst [vmem:[#allocation7 + $0x58] sm:$0xf] %v711
          %776 = vst [vmem:[#allocation7 + $0x5c] sm:$0xf] %v712
          %777 = vst [vmem:[#allocation7 + $0x60] sm:$0xf] %v713
          %778 = vst [vmem:[#allocation7 + $0x64] sm:$0xf] %v714
          %779 = vst [vmem:[#allocation7 + $0x68] sm:$0xf] %v715
          %780 = vst [vmem:[#allocation7 + $0x6c] sm:$0xf] %v716
          %781 = vst [vmem:[#allocation7 + $0x70] sm:$0xf] %v717
          %782 = vst [vmem:[#allocation7 + $0x74] sm:$0xf] %v718
          %783 = vst [vmem:[#allocation7 + $0x78] sm:$0xf] %v719
          %784 = vst [vmem:[#allocation7 + $0x7c] sm:$0xf] %v720
        $region44: #{tpu_custom_call.1} parent=35 // pred_fallthru
          _
        %s785 = smul.u32 %s22, 128
        %p786 = scmp.lt.s32.totalorder %s21, 0
        %s787 = ssub.s32 0, %s21
        %s788 = scalar_select %p786, %s787, %s21
        %s789 = sand.u32 %s788, 1
        %s790 = ssub.s32 0, %s789
        %s791 = scalar_select %p786, %s790, %s789
        %p792 = scmp.ne.s32.totalorder %s791, 0
        %p793 = scmp.lt.s32.totalorder %s791, 0
        %p794 = pnand %p793, %p792
        %p795 = pneg %p794
        %s796 = sadd.s32 %s791, 2
        %s797 = scalar_select %p795, %s796, %s791
        %p798 = scmp.eq.s32.totalorder %s797, 0
        // Predicated region
        $region45: #{tpu_custom_call.1} parent=35 // pred_check
          %p799 = pneg %p798
        $region46: #{tpu_custom_call.1} parent=35 // pred_check_branch
          %801 = sbr.rel (%p799) target = $region48
        $region47: #{tpu_custom_call.1} parent=35 // pred_region
          %v802 = vld [vmem:[%s214] sm:$0xff]
          %v803 = vld [vmem:[%s214 + $0x8] sm:$0xff]
          %v804 = vld [vmem:[%s214 + $0x10] sm:$0xff]
          %v805 = vld [vmem:[%s214 + $0x18] sm:$0xff]
          %v806 = vld [vmem:[%s214 + $0x20] sm:$0xff]
          %v807 = vld [vmem:[%s214 + $0x28] sm:$0xff]
          %v808 = vld [vmem:[%s214 + $0x30] sm:$0xff]
          %v809 = vld [vmem:[%s214 + $0x38] sm:$0xff]
          %v810 = vunpack.c.l.s8.bf16 %v802
          %v811 = vunpack.c.l.s8.bf16 %v803
          %v812 = vunpack.c.h.s8.bf16 %v802
          %v813 = vunpack.c.h.s8.bf16 %v803
          %v814 = vunpack.c.l.s8.bf16 %v804
          %v815 = vunpack.c.l.s8.bf16 %v805
          %v816 = vunpack.c.h.s8.bf16 %v804
          %v817 = vunpack.c.h.s8.bf16 %v805
          %v818 = vunpack.c.l.s8.bf16 %v806
          %v819 = vunpack.c.l.s8.bf16 %v807
          %v820 = vunpack.c.h.s8.bf16 %v806
          %v821 = vunpack.c.h.s8.bf16 %v807
          %v822 = vunpack.c.l.s8.bf16 %v808
          %v823 = vunpack.c.l.s8.bf16 %v809
          %v824 = vunpack.c.h.s8.bf16 %v808
          %v825 = vunpack.c.h.s8.bf16 %v809
          %v826 = vld [vmem:[#allocation7] sm:$0xf]
          %v827 = vld [vmem:[#allocation7 + $0x4] sm:$0xf]
          %v828 = vld [vmem:[#allocation7 + $0x8] sm:$0xf]
          %v829 = vld [vmem:[#allocation7 + $0xc] sm:$0xf]
          %v830 = vld [vmem:[#allocation7 + $0x10] sm:$0xf]
          %v831 = vld [vmem:[#allocation7 + $0x14] sm:$0xf]
          %v832 = vld [vmem:[#allocation7 + $0x18] sm:$0xf]
          %v833 = vld [vmem:[#allocation7 + $0x1c] sm:$0xf]
          %v834 = vld [vmem:[#allocation7 + $0x20] sm:$0xf]
          %v835 = vld [vmem:[#allocation7 + $0x24] sm:$0xf]
          %v836 = vld [vmem:[#allocation7 + $0x28] sm:$0xf]
          %v837 = vld [vmem:[#allocation7 + $0x2c] sm:$0xf]
          %v838 = vld [vmem:[#allocation7 + $0x30] sm:$0xf]
          %v839 = vld [vmem:[#allocation7 + $0x34] sm:$0xf]
          %v840 = vld [vmem:[#allocation7 + $0x38] sm:$0xf]
          %v841 = vld [vmem:[#allocation7 + $0x3c] sm:$0xf]
          %v842 = vld [vmem:[#allocation7 + $0x40] sm:$0xf]
          %v843 = vld [vmem:[#allocation7 + $0x44] sm:$0xf]
          %v844 = vld [vmem:[#allocation7 + $0x48] sm:$0xf]
          %v845 = vld [vmem:[#allocation7 + $0x4c] sm:$0xf]
          %v846 = vld [vmem:[#allocation7 + $0x50] sm:$0xf]
          %v847 = vld [vmem:[#allocation7 + $0x54] sm:$0xf]
          %v848 = vld [vmem:[#allocation7 + $0x58] sm:$0xf]
          %v849 = vld [vmem:[#allocation7 + $0x5c] sm:$0xf]
          %v850 = vld [vmem:[#allocation7 + $0x60] sm:$0xf]
          %v851 = vld [vmem:[#allocation7 + $0x64] sm:$0xf]
          %v852 = vld [vmem:[#allocation7 + $0x68] sm:$0xf]
          %v853 = vld [vmem:[#allocation7 + $0x6c] sm:$0xf]
          %v854 = vld [vmem:[#allocation7 + $0x70] sm:$0xf]
          %v855 = vld [vmem:[#allocation7 + $0x74] sm:$0xf]
          %v856 = vld [vmem:[#allocation7 + $0x78] sm:$0xf]
          %v857 = vld [vmem:[#allocation7 + $0x7c] sm:$0xf]
          %v890 = vunpack.c.l.b16 %v826
          %v891 = vunpack.c.l.b16 %v827
          %v892 = vunpack.c.l.b16 %v828
          %v893 = vunpack.c.l.b16 %v829
          %v894 = vunpack.c.l.b16 %v830
          %v895 = vunpack.c.l.b16 %v831
          %v896 = vunpack.c.l.b16 %v832
          %v897 = vunpack.c.l.b16 %v833
          %v898 = vunpack.c.l.b16 %v834
          %v899 = vunpack.c.l.b16 %v835
          %v900 = vunpack.c.l.b16 %v836
          %v901 = vunpack.c.l.b16 %v837
          %v902 = vunpack.c.l.b16 %v838
          %v903 = vunpack.c.l.b16 %v839
          %v904 = vunpack.c.l.b16 %v840
          %v905 = vunpack.c.l.b16 %v841
          %v906 = vunpack.c.l.b16 %v842
          %v907 = vunpack.c.l.b16 %v843
          %v908 = vunpack.c.l.b16 %v844
          %v909 = vunpack.c.l.b16 %v845
          %v910 = vunpack.c.l.b16 %v846
          %v911 = vunpack.c.l.b16 %v847
          %v912 = vunpack.c.l.b16 %v848
          %v913 = vunpack.c.l.b16 %v849
          %v914 = vunpack.c.l.b16 %v850
          %v915 = vunpack.c.l.b16 %v851
          %v916 = vunpack.c.l.b16 %v852
          %v917 = vunpack.c.l.b16 %v853
          %v918 = vunpack.c.l.b16 %v854
          %v919 = vunpack.c.l.b16 %v855
          %v920 = vunpack.c.l.b16 %v856
          %v921 = vunpack.c.l.b16 %v857
          %v922 = vpack.c.b16 %v891, %v890
          %v923 = vpack.c.b16 %v893, %v892
          %v924 = vpack.c.b16 %v895, %v894
          %v925 = vpack.c.b16 %v897, %v896
          %v926 = vpack.c.b16 %v899, %v898
          %v927 = vpack.c.b16 %v901, %v900
          %v928 = vpack.c.b16 %v903, %v902
          %v929 = vpack.c.b16 %v905, %v904
          %v930 = vpack.c.b16 %v907, %v906
          %v931 = vpack.c.b16 %v909, %v908
          %v932 = vpack.c.b16 %v911, %v910
          %v933 = vpack.c.b16 %v913, %v912
          %v934 = vpack.c.b16 %v915, %v914
          %v935 = vpack.c.b16 %v917, %v916
          %v936 = vpack.c.b16 %v919, %v918
          %v937 = vpack.c.b16 %v921, %v920
          %954 = vmatprep.subr.bf16.mxu0 0
          %955 = vmatpush1.bf16.msra.mxu0 %v922
          %956 = vmatprep.subr.bf16.mxu0 0
          %957 = vmatpush1.bf16.msra.mxu0 %v923
          %958 = vmatprep.subr.bf16.mxu0 0
          %959 = vmatpush1.bf16.msra.mxu0 %v924
          %960 = vmatprep.subr.bf16.mxu0 0
          %961 = vmatpush1.bf16.msra.mxu0 %v925
          %962 = vmatprep.subr.bf16.mxu0 0
          %963 = vmatpush1.bf16.msra.mxu0 %v926
          %964 = vmatprep.subr.bf16.mxu0 0
          %965 = vmatpush1.bf16.msra.mxu0 %v927
          %966 = vmatprep.subr.bf16.mxu0 0
          %967 = vmatpush1.bf16.msra.mxu0 %v928
          %968 = vmatprep.subr.bf16.mxu0 0
          %969 = vmatpush1.bf16.msra.mxu0 %v929
          %970 = vmatprep.subr.bf16.mxu0 0
          %971 = vmatpush1.bf16.msra.mxu0 %v930
          %972 = vmatprep.subr.bf16.mxu0 0
          %973 = vmatpush1.bf16.msra.mxu0 %v931
          %974 = vmatprep.subr.bf16.mxu0 0
          %975 = vmatpush1.bf16.msra.mxu0 %v932
          %976 = vmatprep.subr.bf16.mxu0 0
          %977 = vmatpush1.bf16.msra.mxu0 %v933
          %978 = vmatprep.subr.bf16.mxu0 0
          %979 = vmatpush1.bf16.msra.mxu0 %v934
          %980 = vmatprep.subr.bf16.mxu0 0
          %981 = vmatpush1.bf16.msra.mxu0 %v935
          %982 = vmatprep.subr.bf16.mxu0 0
          %983 = vmatpush1.bf16.msra.mxu0 %v936
          %984 = vmatprep.subr.bf16.mxu0 0
          %985 = vmatpush1.bf16.msra.mxu0 %v937
          %986 = vmatprep.mubr.bf16.mxu0 %v811
          %987 = vmatmul.mubr.bf16.gmra.mrb[0].mxu0 %v810
          %v988 = vpop.f32.mrb[0].mxu0
          %v989 = vadd.f32 0.0, %v988
          %v990 = vpop.f32.mrb[0].mxu0
          %v991 = vpop.f32.mrb[0].mxu0
          %v992 = vadd.f32 0.0, %v991
          %v993 = vpop.f32.mrb[0].mxu0
          %994 = vmatprep.mubr.bf16.mxu0 %v813
          %995 = vmatmul.mubr.bf16.gmra.mrb[0].mxu0 %v812
          %v996 = vpop.f32.mrb[0].mxu0
          %v997 = vadd.f32 0.0, %v996
          %v998 = vpop.f32.mrb[0].mxu0
          %v999 = vpop.f32.mrb[0].mxu0
          %v1000 = vadd.f32 0.0, %v999
          %v1001 = vpop.f32.mrb[0].mxu0
          %1002 = vmatprep.mubr.bf16.mxu0 %v815
          %1003 = vmatmul.mubr.bf16.gmra.mrb[0].mxu0 %v814
          %v1004 = vpop.f32.mrb[0].mxu0
          %v1005 = vadd.f32 0.0, %v1004
          %v1006 = vpop.f32.mrb[0].mxu0
          %v1007 = vpop.f32.mrb[0].mxu0
          %v1008 = vadd.f32 0.0, %v1007
          %v1009 = vpop.f32.mrb[0].mxu0
          %1010 = vmatprep.mubr.bf16.mxu0 %v817
          %1011 = vmatmul.mubr.bf16.gmra.mrb[0].mxu0 %v816
          %v1012 = vpop.f32.mrb[0].mxu0
          %v1013 = vadd.f32 0.0, %v1012
          %v1014 = vpop.f32.mrb[0].mxu0
          %v1015 = vpop.f32.mrb[0].mxu0
          %v1016 = vadd.f32 0.0, %v1015
          %v1017 = vpop.f32.mrb[0].mxu0
          %1018 = vmatprep.mubr.bf16.mxu0 %v819
          %1019 = vmatmul.mubr.bf16.gmra.mrb[0].mxu0 %v818
          %v1020 = vpop.f32.mrb[0].mxu0
          %v1021 = vadd.f32 0.0, %v1020
          %v1022 = vpop.f32.mrb[0].mxu0
          %v1023 = vpop.f32.mrb[0].mxu0
          %v1024 = vadd.f32 0.0, %v1023
          %v1025 = vpop.f32.mrb[0].mxu0
          %1026 = vmatprep.mubr.bf16.mxu0 %v821
          %1027 = vmatmul.mubr.bf16.gmra.mrb[0].mxu0 %v820
          %v1028 = vpop.f32.mrb[0].mxu0
          %v1029 = vadd.f32 0.0, %v1028
          %v1030 = vpop.f32.mrb[0].mxu0
          %v1031 = vpop.f32.mrb[0].mxu0
          %v1032 = vadd.f32 0.0, %v1031
          %v1033 = vpop.f32.mrb[0].mxu0
          %1034 = vmatprep.mubr.bf16.mxu0 %v823
          %1035 = vmatmul.mubr.bf16.gmra.mrb[0].mxu0 %v822
          %v1036 = vpop.f32.mrb[0].mxu0
          %v1037 = vadd.f32 0.0, %v1036
          %v1038 = vpop.f32.mrb[0].mxu0
          %v1039 = vpop.f32.mrb[0].mxu0
          %v1040 = vadd.f32 0.0, %v1039
          %v1041 = vpop.f32.mrb[0].mxu0
          %1042 = vmatprep.mubr.bf16.mxu0 %v825
          %1043 = vmatmul.mubr.bf16.gmra.mrb[0].mxu0 %v824
          %v1044 = vpop.f32.mrb[0].mxu0
          %v1045 = vadd.f32 0.0, %v1044
          %v1046 = vpop.f32.mrb[0].mxu0
          %v1047 = vpop.f32.mrb[0].mxu0
          %v1048 = vadd.f32 0.0, %v1047
          %v1049 = vpop.f32.mrb[0].mxu0
          %1050 = vdwg.mxu0
          %v1051 = vpack.c.bf16 %v992, %v989
          %v1052 = vpack.c.bf16 %v1000, %v997
          %v1053 = vpack.c.bf16 %v1008, %v1005
          %v1054 = vpack.c.bf16 %v1016, %v1013
          %v1055 = vpack.c.bf16 %v1024, %v1021
          %v1056 = vpack.c.bf16 %v1032, %v1029
          %v1057 = vpack.c.bf16 %v1040, %v1037
          %v1058 = vpack.c.bf16 %v1048, %v1045
          %v1059 = vld [vmem:[#allocation4] sm:$0xf]
          %v1060 = vld [vmem:[#allocation4 + $0x4] sm:$0xf]
          %v1061 = vld [vmem:[#allocation4 + $0x8] sm:$0xf]
          %v1062 = vld [vmem:[#allocation4 + $0xc] sm:$0xf]
          %v1063 = vld [vmem:[#allocation4 + $0x10] sm:$0xf]
          %v1064 = vld [vmem:[#allocation4 + $0x14] sm:$0xf]
          %v1065 = vld [vmem:[#allocation4 + $0x18] sm:$0xf]
          %v1066 = vld [vmem:[#allocation4 + $0x1c] sm:$0xf]
          %v1067 = vld [vmem:[#allocation4 + $0x20] sm:$0xf]
          %v1068 = vld [vmem:[#allocation4 + $0x24] sm:$0xf]
          %v1069 = vld [vmem:[#allocation4 + $0x28] sm:$0xf]
          %v1070 = vld [vmem:[#allocation4 + $0x2c] sm:$0xf]
          %v1071 = vld [vmem:[#allocation4 + $0x30] sm:$0xf]
          %v1072 = vld [vmem:[#allocation4 + $0x34] sm:$0xf]
          %v1073 = vld [vmem:[#allocation4 + $0x38] sm:$0xf]
          %v1074 = vld [vmem:[#allocation4 + $0x3c] sm:$0xf]
          %v1091 = vunpack.c.l.b16 %v1059
          %v1092 = vunpack.c.l.b16 %v1060
          %v1093 = vunpack.c.l.b16 %v1061
          %v1094 = vunpack.c.l.b16 %v1062
          %v1095 = vunpack.c.l.b16 %v1063
          %v1096 = vunpack.c.l.b16 %v1064
          %v1097 = vunpack.c.l.b16 %v1065
          %v1098 = vunpack.c.l.b16 %v1066
          %v1099 = vunpack.c.l.b16 %v1067
          %v1100 = vunpack.c.l.b16 %v1068
          %v1101 = vunpack.c.l.b16 %v1069
          %v1102 = vunpack.c.l.b16 %v1070
          %v1103 = vunpack.c.l.b16 %v1071
          %v1104 = vunpack.c.l.b16 %v1072
          %v1105 = vunpack.c.l.b16 %v1073
          %v1106 = vunpack.c.l.b16 %v1074
          %v1107 = vpack.c.b16 %v1092, %v1091
          %v1108 = vpack.c.b16 %v1094, %v1093
          %v1109 = vpack.c.b16 %v1096, %v1095
          %v1110 = vpack.c.b16 %v1098, %v1097
          %v1111 = vpack.c.b16 %v1100, %v1099
          %v1112 = vpack.c.b16 %v1102, %v1101
          %v1113 = vpack.c.b16 %v1104, %v1103
          %v1114 = vpack.c.b16 %v1106, %v1105
          %1123 = vmatprep.subr.bf16.mxu0 0
          %1124 = vmatpush1.bf16.msra.mxu0 %v1107
          %1125 = vmatprep.subr.bf16.mxu0 0
          %1126 = vmatpush1.bf16.msra.mxu0 %v1108
          %1127 = vmatprep.subr.bf16.mxu0 0
          %1128 = vmatpush1.bf16.msra.mxu0 %v1109
          %1129 = vmatprep.subr.bf16.mxu0 0
          %1130 = vmatpush1.bf16.msra.mxu0 %v1110
          %1131 = vmatprep.subr.bf16.mxu0 0
          %1132 = vmatpush1.bf16.msra.mxu0 %v1111
          %1133 = vmatprep.subr.bf16.mxu0 0
          %1134 = vmatpush1.bf16.msra.mxu0 %v1112
          %1135 = vmatprep.subr.bf16.mxu0 0
          %1136 = vmatpush1.bf16.msra.mxu0 %v1113
          %1137 = vmatprep.subr.bf16.mxu0 0
          %1138 = vmatpush1.bf16.msra.mxu0 %v1114
          %1139 = vmatprep.subr.bf16.mxu0 0
          %1140 = vmatpush1.bf16.msra.mxu0 0
          %1141 = vmatprep.subr.bf16.mxu0 0
          %1142 = vmatpush1.bf16.msra.mxu0 0
          %1143 = vmatprep.subr.bf16.mxu0 0
          %1144 = vmatpush1.bf16.msra.mxu0 0
          %1145 = vmatprep.subr.bf16.mxu0 0
          %1146 = vmatpush1.bf16.msra.mxu0 0
          %1147 = vmatprep.subr.bf16.mxu0 0
          %1148 = vmatpush1.bf16.msra.mxu0 0
          %1149 = vmatprep.subr.bf16.mxu0 0
          %1150 = vmatpush1.bf16.msra.mxu0 0
          %1151 = vmatprep.subr.bf16.mxu0 0
          %1152 = vmatpush1.bf16.msra.mxu0 0
          %1153 = vmatprep.subr.bf16.mxu0 0
          %1154 = vmatpush1.bf16.msra.mxu0 0
          %1155 = vmatprep.mubr.bf16.mxu0 0
          %1156 = vmatmul.mubr.bf16.gmra.mrb[0].mxu0 %v1051
          %v1157 = vpop.f32.mrb[0].mxu0
          %v1158 = vadd.f32 0.0, %v1157
          %v1159 = vpop.f32.mrb[0].mxu0
          %v1160 = vpop.f32.mrb[0].mxu0
          %v1161 = vadd.f32 0.0, %v1160
          %v1162 = vpop.f32.mrb[0].mxu0
          %1163 = vmatprep.mubr.bf16.mxu0 0
          %1164 = vmatmul.mubr.bf16.gmra.mrb[0].mxu0 %v1052
          %v1165 = vpop.f32.mrb[0].mxu0
          %v1166 = vadd.f32 0.0, %v1165
          %v1167 = vpop.f32.mrb[0].mxu0
          %v1168 = vpop.f32.mrb[0].mxu0
          %v1169 = vadd.f32 0.0, %v1168
          %v1170 = vpop.f32.mrb[0].mxu0
          %1171 = vmatprep.mubr.bf16.mxu0 0
          %1172 = vmatmul.mubr.bf16.gmra.mrb[0].mxu0 %v1053
          %v1173 = vpop.f32.mrb[0].mxu0
          %v1174 = vadd.f32 0.0, %v1173
          %v1175 = vpop.f32.mrb[0].mxu0
          %v1176 = vpop.f32.mrb[0].mxu0
          %v1177 = vadd.f32 0.0, %v1176
          %v1178 = vpop.f32.mrb[0].mxu0
          %1179 = vmatprep.mubr.bf16.mxu0 0
          %1180 = vmatmul.mubr.bf16.gmra.mrb[0].mxu0 %v1054
          %v1181 = vpop.f32.mrb[0].mxu0
          %v1182 = vadd.f32 0.0, %v1181
          %v1183 = vpop.f32.mrb[0].mxu0
          %v1184 = vpop.f32.mrb[0].mxu0
          %v1185 = vadd.f32 0.0, %v1184
          %v1186 = vpop.f32.mrb[0].mxu0
          %1187 = vmatprep.mubr.bf16.mxu0 0
          %1188 = vmatmul.mubr.bf16.gmra.mrb[0].mxu0 %v1055
          %v1189 = vpop.f32.mrb[0].mxu0
          %v1190 = vadd.f32 0.0, %v1189
          %v1191 = vpop.f32.mrb[0].mxu0
          %v1192 = vpop.f32.mrb[0].mxu0
          %v1193 = vadd.f32 0.0, %v1192
          %v1194 = vpop.f32.mrb[0].mxu0
          %1195 = vmatprep.mubr.bf16.mxu0 0
          %1196 = vmatmul.mubr.bf16.gmra.mrb[0].mxu0 %v1056
          %v1197 = vpop.f32.mrb[0].mxu0
          %v1198 = vadd.f32 0.0, %v1197
          %v1199 = vpop.f32.mrb[0].mxu0
          %v1200 = vpop.f32.mrb[0].mxu0
          %v1201 = vadd.f32 0.0, %v1200
          %v1202 = vpop.f32.mrb[0].mxu0
          %1203 = vmatprep.mubr.bf16.mxu0 0
          %1204 = vmatmul.mubr.bf16.gmra.mrb[0].mxu0 %v1057
          %v1205 = vpop.f32.mrb[0].mxu0
          %v1206 = vadd.f32 0.0, %v1205
          %v1207 = vpop.f32.mrb[0].mxu0
          %v1208 = vpop.f32.mrb[0].mxu0
          %v1209 = vadd.f32 0.0, %v1208
          %v1210 = vpop.f32.mrb[0].mxu0
          %1211 = vmatprep.mubr.bf16.mxu0 0
          %1212 = vmatmul.mubr.bf16.gmra.mrb[0].mxu0 %v1058
          %v1213 = vpop.f32.mrb[0].mxu0
          %v1214 = vadd.f32 0.0, %v1213
          %v1215 = vpop.f32.mrb[0].mxu0
          %v1216 = vpop.f32.mrb[0].mxu0
          %v1217 = vadd.f32 0.0, %v1216
          %v1218 = vpop.f32.mrb[0].mxu0
          %1219 = vdwg.mxu0
          %s1220 = scalar_lea.vmem [#allocation2], %s785
          %v1221 = vld [vmem:[%s1220] sm:$0xff]
          %v1222 = vld [vmem:[%s1220 + $0x8] sm:$0xff]
          %v1223 = vld [vmem:[%s1220 + $0x10] sm:$0xff]
          %v1224 = vld [vmem:[%s1220 + $0x18] sm:$0xff]
          %v1225 = vld [vmem:[%s1220 + $0x20] sm:$0xff]
          %v1226 = vld [vmem:[%s1220 + $0x28] sm:$0xff]
          %v1227 = vld [vmem:[%s1220 + $0x30] sm:$0xff]
          %v1228 = vld [vmem:[%s1220 + $0x38] sm:$0xff]
          %v1229 = vld [vmem:[%s1220 + $0x40] sm:$0xff]
          %v1230 = vld [vmem:[%s1220 + $0x48] sm:$0xff]
          %v1231 = vld [vmem:[%s1220 + $0x50] sm:$0xff]
          %v1232 = vld [vmem:[%s1220 + $0x58] sm:$0xff]
          %v1233 = vld [vmem:[%s1220 + $0x60] sm:$0xff]
          %v1234 = vld [vmem:[%s1220 + $0x68] sm:$0xff]
          %v1235 = vld [vmem:[%s1220 + $0x70] sm:$0xff]
          %v1236 = vld [vmem:[%s1220 + $0x78] sm:$0xff]
          %v1237 = vadd.f32 %v1221, %v1158
          %v1238 = vadd.f32 %v1222, %v1161
          %v1239 = vadd.f32 %v1223, %v1166
          %v1240 = vadd.f32 %v1224, %v1169
          %v1241 = vadd.f32 %v1225, %v1174
          %v1242 = vadd.f32 %v1226, %v1177
          %v1243 = vadd.f32 %v1227, %v1182
          %v1244 = vadd.f32 %v1228, %v1185
          %v1245 = vadd.f32 %v1229, %v1190
          %v1246 = vadd.f32 %v1230, %v1193
          %v1247 = vadd.f32 %v1231, %v1198
          %v1248 = vadd.f32 %v1232, %v1201
          %v1249 = vadd.f32 %v1233, %v1206
          %v1250 = vadd.f32 %v1234, %v1209
          %v1251 = vadd.f32 %v1235, %v1214
          %v1252 = vadd.f32 %v1236, %v1217
          %v1253 = vmax.f32 %v1237, 0.0
          %v1254 = vmax.f32 %v1238, 0.0
          %v1255 = vmax.f32 %v1239, 0.0
          %v1256 = vmax.f32 %v1240, 0.0
          %v1257 = vmax.f32 %v1241, 0.0
          %v1258 = vmax.f32 %v1242, 0.0
          %v1259 = vmax.f32 %v1243, 0.0
          %v1260 = vmax.f32 %v1244, 0.0
          %v1261 = vmax.f32 %v1245, 0.0
          %v1262 = vmax.f32 %v1246, 0.0
          %v1263 = vmax.f32 %v1247, 0.0
          %v1264 = vmax.f32 %v1248, 0.0
          %v1265 = vmax.f32 %v1249, 0.0
          %v1266 = vmax.f32 %v1250, 0.0
          %v1267 = vmax.f32 %v1251, 0.0
          %v1268 = vmax.f32 %v1252, 0.0
          %v1269 = vpack.c.bf16 %v1254, %v1253
          %v1270 = vpack.c.bf16 %v1256, %v1255
          %v1271 = vpack.c.bf16 %v1258, %v1257
          %v1272 = vpack.c.bf16 %v1260, %v1259
          %v1273 = vpack.c.bf16 %v1262, %v1261
          %v1274 = vpack.c.bf16 %v1264, %v1263
          %v1275 = vpack.c.bf16 %v1266, %v1265
          %v1276 = vpack.c.bf16 %v1268, %v1267
          %s1277 = sshra.s32 %s785, 4
          %s1278 = sand.u32 %s785, 15
          %s1279 = smul.addr %s1277, 8
          %s1280 = scalar_lea.vmem [#allocation3], %s1279
          %1281 = vst [vmem:[%s1280] sm:$0xff] %v1269
          %1282 = vst [vmem:[%s1280 + $0x8] sm:$0xff] %v1270
          %1283 = vst [vmem:[%s1280 + $0x10] sm:$0xff] %v1271
          %1284 = vst [vmem:[%s1280 + $0x18] sm:$0xff] %v1272
          %1285 = vst [vmem:[%s1280 + $0x20] sm:$0xff] %v1273
          %1286 = vst [vmem:[%s1280 + $0x28] sm:$0xff] %v1274
          %1287 = vst [vmem:[%s1280 + $0x30] sm:$0xff] %v1275
          %1288 = vst [vmem:[%s1280 + $0x38] sm:$0xff] %v1276
        $region48: #{tpu_custom_call.1} parent=35 // pred_fallthru
          _
        %p1289 = scmp.eq.s32.totalorder %s797, 1
        // Predicated region
        $region49: #{tpu_custom_call.1} parent=35 // pred_check
          %p1290 = pneg %p1289
        $region50: #{tpu_custom_call.1} parent=35 // pred_check_branch
          %1292 = sbr.rel (%p1290) target = $region52
        $region51: #{tpu_custom_call.1} parent=35 // pred_region
          %v1293 = vld [vmem:[%s214] sm:$0xff]
          %v1294 = vld [vmem:[%s214 + $0x8] sm:$0xff]
          %v1295 = vld [vmem:[%s214 + $0x10] sm:$0xff]
          %v1296 = vld [vmem:[%s214 + $0x18] sm:$0xff]
          %v1297 = vld [vmem:[%s214 + $0x20] sm:$0xff]
          %v1298 = vld [vmem:[%s214 + $0x28] sm:$0xff]
          %v1299 = vld [vmem:[%s214 + $0x30] sm:$0xff]
          %v1300 = vld [vmem:[%s214 + $0x38] sm:$0xff]
          %v1301 = vunpack.c.l.s8.bf16 %v1293
          %v1302 = vunpack.c.l.s8.bf16 %v1294
          %v1303 = vunpack.c.h.s8.bf16 %v1293
          %v1304 = vunpack.c.h.s8.bf16 %v1294
          %v1305 = vunpack.c.l.s8.bf16 %v1295
          %v1306 = vunpack.c.l.s8.bf16 %v1296
          %v1307 = vunpack.c.h.s8.bf16 %v1295
          %v1308 = vunpack.c.h.s8.bf16 %v1296
          %v1309 = vunpack.c.l.s8.bf16 %v1297
          %v1310 = vunpack.c.l.s8.bf16 %v1298
          %v1311 = vunpack.c.h.s8.bf16 %v1297
          %v1312 = vunpack.c.h.s8.bf16 %v1298
          %v1313 = vunpack.c.l.s8.bf16 %v1299
          %v1314 = vunpack.c.l.s8.bf16 %v1300
          %v1315 = vunpack.c.h.s8.bf16 %v1299
          %v1316 = vunpack.c.h.s8.bf16 %v1300
          %v1317 = vld [vmem:[#allocation3] sm:$0xff]
          %v1318 = vld [vmem:[#allocation3 + $0x8] sm:$0xff]
          %v1319 = vld [vmem:[#allocation3 + $0x10] sm:$0xff]
          %v1320 = vld [vmem:[#allocation3 + $0x18] sm:$0xff]
          %v1321 = vld [vmem:[#allocation3 + $0x20] sm:$0xff]
          %v1322 = vld [vmem:[#allocation3 + $0x28] sm:$0xff]
          %v1323 = vld [vmem:[#allocation3 + $0x30] sm:$0xff]
          %v1324 = vld [vmem:[#allocation3 + $0x38] sm:$0xff]
          %v1325 = vld [vmem:[#allocation3 + $0x40] sm:$0xff]
          %v1326 = vld [vmem:[#allocation3 + $0x48] sm:$0xff]
          %v1327 = vld [vmem:[#allocation3 + $0x50] sm:$0xff]
          %v1328 = vld [vmem:[#allocation3 + $0x58] sm:$0xff]
          %v1329 = vld [vmem:[#allocation3 + $0x60] sm:$0xff]
          %v1330 = vld [vmem:[#allocation3 + $0x68] sm:$0xff]
          %v1331 = vld [vmem:[#allocation3 + $0x70] sm:$0xff]
          %v1332 = vld [vmem:[#allocation3 + $0x78] sm:$0xff]
          %1333 = vmatprep.subr.bf16.mxu0 0
          %1334 = vmatpush1.bf16.msra.mxu0 %v1317
          %1335 = vmatprep.subr.bf16.mxu0 0
          %1336 = vmatpush1.bf16.msra.mxu0 %v1318
          %1337 = vmatprep.subr.bf16.mxu0 0
          %1338 = vmatpush1.bf16.msra.mxu0 %v1319
          %1339 = vmatprep.subr.bf16.mxu0 0
          %1340 = vmatpush1.bf16.msra.mxu0 %v1320
          %1341 = vmatprep.subr.bf16.mxu0 0
          %1342 = vmatpush1.bf16.msra.mxu0 %v1321
          %1343 = vmatprep.subr.bf16.mxu0 0
          %1344 = vmatpush1.bf16.msra.mxu0 %v1322
          %1345 = vmatprep.subr.bf16.mxu0 0
          %1346 = vmatpush1.bf16.msra.mxu0 %v1323
          %1347 = vmatprep.subr.bf16.mxu0 0
          %1348 = vmatpush1.bf16.msra.mxu0 %v1324
          %1349 = vmatprep.subr.bf16.mxu0 0
          %1350 = vmatpush1.bf16.msra.mxu0 %v1325
          %1351 = vmatprep.subr.bf16.mxu0 0
          %1352 = vmatpush1.bf16.msra.mxu0 %v1326
          %1353 = vmatprep.subr.bf16.mxu0 0
          %1354 = vmatpush1.bf16.msra.mxu0 %v1327
          %1355 = vmatprep.subr.bf16.mxu0 0
          %1356 = vmatpush1.bf16.msra.mxu0 %v1328
          %1357 = vmatprep.subr.bf16.mxu0 0
          %1358 = vmatpush1.bf16.msra.mxu0 %v1329
          %1359 = vmatprep.subr.bf16.mxu0 0
          %1360 = vmatpush1.bf16.msra.mxu0 %v1330
          %1361 = vmatprep.subr.bf16.mxu0 0
          %1362 = vmatpush1.bf16.msra.mxu0 %v1331
          %1363 = vmatprep.subr.bf16.mxu0 0
          %1364 = vmatpush1.bf16.msra.mxu0 %v1332
          %1365 = vmatprep.mubr.bf16.mxu0 %v1302
          %1366 = vmatmul.mubr.bf16.gmra.mrb[0].mxu0 %v1301
          %v1367 = vpop.f32.mrb[0].mxu0
          %v1368 = vadd.f32 0.0, %v1367
          %v1369 = vpop.f32.mrb[0].mxu0
          %v1370 = vpop.f32.mrb[0].mxu0
          %v1371 = vadd.f32 0.0, %v1370
          %v1372 = vpop.f32.mrb[0].mxu0
          %1373 = vmatprep.mubr.bf16.mxu0 %v1304
          %1374 = vmatmul.mubr.bf16.gmra.mrb[0].mxu0 %v1303
          %v1375 = vpop.f32.mrb[0].mxu0
          %v1376 = vadd.f32 0.0, %v1375
          %v1377 = vpop.f32.mrb[0].mxu0
          %v1378 = vpop.f32.mrb[0].mxu0
          %v1379 = vadd.f32 0.0, %v1378
          %v1380 = vpop.f32.mrb[0].mxu0
          %1381 = vmatprep.mubr.bf16.mxu0 %v1306
          %1382 = vmatmul.mubr.bf16.gmra.mrb[0].mxu0 %v1305
          %v1383 = vpop.f32.mrb[0].mxu0
          %v1384 = vadd.f32 0.0, %v1383
          %v1385 = vpop.f32.mrb[0].mxu0
          %v1386 = vpop.f32.mrb[0].mxu0
          %v1387 = vadd.f32 0.0, %v1386
          %v1388 = vpop.f32.mrb[0].mxu0
          %1389 = vmatprep.mubr.bf16.mxu0 %v1308
          %1390 = vmatmul.mubr.bf16.gmra.mrb[0].mxu0 %v1307
          %v1391 = vpop.f32.mrb[0].mxu0
          %v1392 = vadd.f32 0.0, %v1391
          %v1393 = vpop.f32.mrb[0].mxu0
          %v1394 = vpop.f32.mrb[0].mxu0
          %v1395 = vadd.f32 0.0, %v1394
          %v1396 = vpop.f32.mrb[0].mxu0
          %1397 = vmatprep.mubr.bf16.mxu0 %v1310
          %1398 = vmatmul.mubr.bf16.gmra.mrb[0].mxu0 %v1309
          %v1399 = vpop.f32.mrb[0].mxu0
          %v1400 = vadd.f32 0.0, %v1399
          %v1401 = vpop.f32.mrb[0].mxu0
          %v1402 = vpop.f32.mrb[0].mxu0
          %v1403 = vadd.f32 0.0, %v1402
          %v1404 = vpop.f32.mrb[0].mxu0
          %1405 = vmatprep.mubr.bf16.mxu0 %v1312
          %1406 = vmatmul.mubr.bf16.gmra.mrb[0].mxu0 %v1311
          %v1407 = vpop.f32.mrb[0].mxu0
          %v1408 = vadd.f32 0.0, %v1407
          %v1409 = vpop.f32.mrb[0].mxu0
          %v1410 = vpop.f32.mrb[0].mxu0
          %v1411 = vadd.f32 0.0, %v1410
          %v1412 = vpop.f32.mrb[0].mxu0
          %1413 = vmatprep.mubr.bf16.mxu0 %v1314
          %1414 = vmatmul.mubr.bf16.gmra.mrb[0].mxu0 %v1313
          %v1415 = vpop.f32.mrb[0].mxu0
          %v1416 = vadd.f32 0.0, %v1415
          %v1417 = vpop.f32.mrb[0].mxu0
          %v1418 = vpop.f32.mrb[0].mxu0
          %v1419 = vadd.f32 0.0, %v1418
          %v1420 = vpop.f32.mrb[0].mxu0
          %1421 = vmatprep.mubr.bf16.mxu0 %v1316
          %1422 = vmatmul.mubr.bf16.gmra.mrb[0].mxu0 %v1315
          %v1423 = vpop.f32.mrb[0].mxu0
          %v1424 = vadd.f32 0.0, %v1423
          %v1425 = vpop.f32.mrb[0].mxu0
          %v1426 = vpop.f32.mrb[0].mxu0
          %v1427 = vadd.f32 0.0, %v1426
          %v1428 = vpop.f32.mrb[0].mxu0
          %1429 = vdwg.mxu0
          %v1430 = vpack.c.bf16 %v1371, %v1368
          %v1431 = vpack.c.bf16 %v1379, %v1376
          %v1432 = vpack.c.bf16 %v1387, %v1384
          %v1433 = vpack.c.bf16 %v1395, %v1392
          %v1434 = vpack.c.bf16 %v1403, %v1400
          %v1435 = vpack.c.bf16 %v1411, %v1408
          %v1436 = vpack.c.bf16 %v1419, %v1416
          %v1437 = vpack.c.bf16 %v1427, %v1424
          %v1438 = vld [vmem:[#allocation4] sm:$0xf]
          %v1439 = vld [vmem:[#allocation4 + $0x4] sm:$0xf]
          %v1440 = vld [vmem:[#allocation4 + $0x8] sm:$0xf]
          %v1441 = vld [vmem:[#allocation4 + $0xc] sm:$0xf]
          %v1442 = vld [vmem:[#allocation4 + $0x10] sm:$0xf]
          %v1443 = vld [vmem:[#allocation4 + $0x14] sm:$0xf]
          %v1444 = vld [vmem:[#allocation4 + $0x18] sm:$0xf]
          %v1445 = vld [vmem:[#allocation4 + $0x1c] sm:$0xf]
          %v1446 = vld [vmem:[#allocation4 + $0x20] sm:$0xf]
          %v1447 = vld [vmem:[#allocation4 + $0x24] sm:$0xf]
          %v1448 = vld [vmem:[#allocation4 + $0x28] sm:$0xf]
          %v1449 = vld [vmem:[#allocation4 + $0x2c] sm:$0xf]
          %v1450 = vld [vmem:[#allocation4 + $0x30] sm:$0xf]
          %v1451 = vld [vmem:[#allocation4 + $0x34] sm:$0xf]
          %v1452 = vld [vmem:[#allocation4 + $0x38] sm:$0xf]
          %v1453 = vld [vmem:[#allocation4 + $0x3c] sm:$0xf]
          %v1470 = vunpack.c.l.b16 %v1438
          %v1471 = vunpack.c.l.b16 %v1439
          %v1472 = vunpack.c.l.b16 %v1440
          %v1473 = vunpack.c.l.b16 %v1441
          %v1474 = vunpack.c.l.b16 %v1442
          %v1475 = vunpack.c.l.b16 %v1443
          %v1476 = vunpack.c.l.b16 %v1444
          %v1477 = vunpack.c.l.b16 %v1445
          %v1478 = vunpack.c.l.b16 %v1446
          %v1479 = vunpack.c.l.b16 %v1447
          %v1480 = vunpack.c.l.b16 %v1448
          %v1481 = vunpack.c.l.b16 %v1449
          %v1482 = vunpack.c.l.b16 %v1450
          %v1483 = vunpack.c.l.b16 %v1451
          %v1484 = vunpack.c.l.b16 %v1452
          %v1485 = vunpack.c.l.b16 %v1453
          %v1486 = vpack.c.b16 %v1471, %v1470
          %v1487 = vpack.c.b16 %v1473, %v1472
          %v1488 = vpack.c.b16 %v1475, %v1474
          %v1489 = vpack.c.b16 %v1477, %v1476
          %v1490 = vpack.c.b16 %v1479, %v1478
          %v1491 = vpack.c.b16 %v1481, %v1480
          %v1492 = vpack.c.b16 %v1483, %v1482
          %v1493 = vpack.c.b16 %v1485, %v1484
          %1502 = vmatprep.subr.bf16.mxu0 0
          %1503 = vmatpush1.bf16.msra.mxu0 %v1486
          %1504 = vmatprep.subr.bf16.mxu0 0
          %1505 = vmatpush1.bf16.msra.mxu0 %v1487
          %1506 = vmatprep.subr.bf16.mxu0 0
          %1507 = vmatpush1.bf16.msra.mxu0 %v1488
          %1508 = vmatprep.subr.bf16.mxu0 0
          %1509 = vmatpush1.bf16.msra.mxu0 %v1489
          %1510 = vmatprep.subr.bf16.mxu0 0
          %1511 = vmatpush1.bf16.msra.mxu0 %v1490
          %1512 = vmatprep.subr.bf16.mxu0 0
          %1513 = vmatpush1.bf16.msra.mxu0 %v1491
          %1514 = vmatprep.subr.bf16.mxu0 0
          %1515 = vmatpush1.bf16.msra.mxu0 %v1492
          %1516 = vmatprep.subr.bf16.mxu0 0
          %1517 = vmatpush1.bf16.msra.mxu0 %v1493
          %1518 = vmatprep.subr.bf16.mxu0 0
          %1519 = vmatpush1.bf16.msra.mxu0 0
          %1520 = vmatprep.subr.bf16.mxu0 0
          %1521 = vmatpush1.bf16.msra.mxu0 0
          %1522 = vmatprep.subr.bf16.mxu0 0
          %1523 = vmatpush1.bf16.msra.mxu0 0
          %1524 = vmatprep.subr.bf16.mxu0 0
          %1525 = vmatpush1.bf16.msra.mxu0 0
          %1526 = vmatprep.subr.bf16.mxu0 0
          %1527 = vmatpush1.bf16.msra.mxu0 0
          %1528 = vmatprep.subr.bf16.mxu0 0
          %1529 = vmatpush1.bf16.msra.mxu0 0
          %1530 = vmatprep.subr.bf16.mxu0 0
          %1531 = vmatpush1.bf16.msra.mxu0 0
          %1532 = vmatprep.subr.bf16.mxu0 0
          %1533 = vmatpush1.bf16.msra.mxu0 0
          %1534 = vmatprep.mubr.bf16.mxu0 0
          %1535 = vmatmul.mubr.bf16.gmra.mrb[0].mxu0 %v1430
          %v1536 = vpop.f32.mrb[0].mxu0
          %v1537 = vadd.f32 0.0, %v1536
          %v1538 = vpop.f32.mrb[0].mxu0
          %v1539 = vpop.f32.mrb[0].mxu0
          %v1540 = vadd.f32 0.0, %v1539
          %v1541 = vpop.f32.mrb[0].mxu0
          %1542 = vmatprep.mubr.bf16.mxu0 0
          %1543 = vmatmul.mubr.bf16.gmra.mrb[0].mxu0 %v1431
          %v1544 = vpop.f32.mrb[0].mxu0
          %v1545 = vadd.f32 0.0, %v1544
          %v1546 = vpop.f32.mrb[0].mxu0
          %v1547 = vpop.f32.mrb[0].mxu0
          %v1548 = vadd.f32 0.0, %v1547
          %v1549 = vpop.f32.mrb[0].mxu0
          %1550 = vmatprep.mubr.bf16.mxu0 0
          %1551 = vmatmul.mubr.bf16.gmra.mrb[0].mxu0 %v1432
          %v1552 = vpop.f32.mrb[0].mxu0
          %v1553 = vadd.f32 0.0, %v1552
          %v1554 = vpop.f32.mrb[0].mxu0
          %v1555 = vpop.f32.mrb[0].mxu0
          %v1556 = vadd.f32 0.0, %v1555
          %v1557 = vpop.f32.mrb[0].mxu0
          %1558 = vmatprep.mubr.bf16.mxu0 0
          %1559 = vmatmul.mubr.bf16.gmra.mrb[0].mxu0 %v1433
          %v1560 = vpop.f32.mrb[0].mxu0
          %v1561 = vadd.f32 0.0, %v1560
          %v1562 = vpop.f32.mrb[0].mxu0
          %v1563 = vpop.f32.mrb[0].mxu0
          %v1564 = vadd.f32 0.0, %v1563
          %v1565 = vpop.f32.mrb[0].mxu0
          %1566 = vmatprep.mubr.bf16.mxu0 0
          %1567 = vmatmul.mubr.bf16.gmra.mrb[0].mxu0 %v1434
          %v1568 = vpop.f32.mrb[0].mxu0
          %v1569 = vadd.f32 0.0, %v1568
          %v1570 = vpop.f32.mrb[0].mxu0
          %v1571 = vpop.f32.mrb[0].mxu0
          %v1572 = vadd.f32 0.0, %v1571
          %v1573 = vpop.f32.mrb[0].mxu0
          %1574 = vmatprep.mubr.bf16.mxu0 0
          %1575 = vmatmul.mubr.bf16.gmra.mrb[0].mxu0 %v1435
          %v1576 = vpop.f32.mrb[0].mxu0
          %v1577 = vadd.f32 0.0, %v1576
          %v1578 = vpop.f32.mrb[0].mxu0
          %v1579 = vpop.f32.mrb[0].mxu0
          %v1580 = vadd.f32 0.0, %v1579
          %v1581 = vpop.f32.mrb[0].mxu0
          %1582 = vmatprep.mubr.bf16.mxu0 0
          %1583 = vmatmul.mubr.bf16.gmra.mrb[0].mxu0 %v1436
          %v1584 = vpop.f32.mrb[0].mxu0
          %v1585 = vadd.f32 0.0, %v1584
          %v1586 = vpop.f32.mrb[0].mxu0
          %v1587 = vpop.f32.mrb[0].mxu0
          %v1588 = vadd.f32 0.0, %v1587
          %v1589 = vpop.f32.mrb[0].mxu0
          %1590 = vmatprep.mubr.bf16.mxu0 0
          %1591 = vmatmul.mubr.bf16.gmra.mrb[0].mxu0 %v1437
          %v1592 = vpop.f32.mrb[0].mxu0
          %v1593 = vadd.f32 0.0, %v1592
          %v1594 = vpop.f32.mrb[0].mxu0
          %v1595 = vpop.f32.mrb[0].mxu0
          %v1596 = vadd.f32 0.0, %v1595
          %v1597 = vpop.f32.mrb[0].mxu0
          %1598 = vdwg.mxu0
          %s1599 = scalar_lea.vmem [#allocation2], %s785
          %v1600 = vld [vmem:[%s1599] sm:$0xff]
          %v1601 = vld [vmem:[%s1599 + $0x8] sm:$0xff]
          %v1602 = vld [vmem:[%s1599 + $0x10] sm:$0xff]
          %v1603 = vld [vmem:[%s1599 + $0x18] sm:$0xff]
          %v1604 = vld [vmem:[%s1599 + $0x20] sm:$0xff]
          %v1605 = vld [vmem:[%s1599 + $0x28] sm:$0xff]
          %v1606 = vld [vmem:[%s1599 + $0x30] sm:$0xff]
          %v1607 = vld [vmem:[%s1599 + $0x38] sm:$0xff]
          %v1608 = vld [vmem:[%s1599 + $0x40] sm:$0xff]
          %v1609 = vld [vmem:[%s1599 + $0x48] sm:$0xff]
          %v1610 = vld [vmem:[%s1599 + $0x50] sm:$0xff]
          %v1611 = vld [vmem:[%s1599 + $0x58] sm:$0xff]
          %v1612 = vld [vmem:[%s1599 + $0x60] sm:$0xff]
          %v1613 = vld [vmem:[%s1599 + $0x68] sm:$0xff]
          %v1614 = vld [vmem:[%s1599 + $0x70] sm:$0xff]
          %v1615 = vld [vmem:[%s1599 + $0x78] sm:$0xff]
          %v1616 = vadd.f32 %v1600, %v1537
          %v1617 = vadd.f32 %v1601, %v1540
          %v1618 = vadd.f32 %v1602, %v1545
          %v1619 = vadd.f32 %v1603, %v1548
          %v1620 = vadd.f32 %v1604, %v1553
          %v1621 = vadd.f32 %v1605, %v1556
          %v1622 = vadd.f32 %v1606, %v1561
          %v1623 = vadd.f32 %v1607, %v1564
          %v1624 = vadd.f32 %v1608, %v1569
          %v1625 = vadd.f32 %v1609, %v1572
          %v1626 = vadd.f32 %v1610, %v1577
          %v1627 = vadd.f32 %v1611, %v1580
          %v1628 = vadd.f32 %v1612, %v1585
          %v1629 = vadd.f32 %v1613, %v1588
          %v1630 = vadd.f32 %v1614, %v1593
          %v1631 = vadd.f32 %v1615, %v1596
          %v1632 = vmax.f32 %v1616, 0.0
          %v1633 = vmax.f32 %v1617, 0.0
          %v1634 = vmax.f32 %v1618, 0.0
          %v1635 = vmax.f32 %v1619, 0.0
          %v1636 = vmax.f32 %v1620, 0.0
          %v1637 = vmax.f32 %v1621, 0.0
          %v1638 = vmax.f32 %v1622, 0.0
          %v1639 = vmax.f32 %v1623, 0.0
          %v1640 = vmax.f32 %v1624, 0.0
          %v1641 = vmax.f32 %v1625, 0.0
          %v1642 = vmax.f32 %v1626, 0.0
          %v1643 = vmax.f32 %v1627, 0.0
          %v1644 = vmax.f32 %v1628, 0.0
          %v1645 = vmax.f32 %v1629, 0.0
          %v1646 = vmax.f32 %v1630, 0.0
          %v1647 = vmax.f32 %v1631, 0.0
          %v1648 = vpack.c.bf16 %v1633, %v1632
          %v1649 = vpack.c.bf16 %v1635, %v1634
          %v1650 = vpack.c.bf16 %v1637, %v1636
          %v1651 = vpack.c.bf16 %v1639, %v1638
          %v1652 = vpack.c.bf16 %v1641, %v1640
          %v1653 = vpack.c.bf16 %v1643, %v1642
          %v1654 = vpack.c.bf16 %v1645, %v1644
          %v1655 = vpack.c.bf16 %v1647, %v1646
          %v1664 = vunpack.c.l.b16 %v1648
          %v1665 = vunpack.c.h.b16 %v1648
          %v1666 = vunpack.c.l.b16 %v1649
          %v1667 = vunpack.c.h.b16 %v1649
          %v1668 = vunpack.c.l.b16 %v1650
          %v1669 = vunpack.c.h.b16 %v1650
          %v1670 = vunpack.c.l.b16 %v1651
          %v1671 = vunpack.c.h.b16 %v1651
          %v1672 = vunpack.c.l.b16 %v1652
          %v1673 = vunpack.c.h.b16 %v1652
          %v1674 = vunpack.c.l.b16 %v1653
          %v1675 = vunpack.c.h.b16 %v1653
          %v1676 = vunpack.c.l.b16 %v1654
          %v1677 = vunpack.c.h.b16 %v1654
          %v1678 = vunpack.c.l.b16 %v1655
          %v1679 = vunpack.c.h.b16 %v1655
          %v1680 = vpack.c.b16 %v1664, %v1664
          %v1681 = vpack.c.b16 %v1665, %v1665
          %v1682 = vpack.c.b16 %v1666, %v1666
          %v1683 = vpack.c.b16 %v1667, %v1667
          %v1684 = vpack.c.b16 %v1668, %v1668
          %v1685 = vpack.c.b16 %v1669, %v1669
          %v1686 = vpack.c.b16 %v1670, %v1670
          %v1687 = vpack.c.b16 %v1671, %v1671
          %v1688 = vpack.c.b16 %v1672, %v1672
          %v1689 = vpack.c.b16 %v1673, %v1673
          %v1690 = vpack.c.b16 %v1674, %v1674
          %v1691 = vpack.c.b16 %v1675, %v1675
          %v1692 = vpack.c.b16 %v1676, %v1676
          %v1693 = vpack.c.b16 %v1677, %v1677
          %v1694 = vpack.c.b16 %v1678, %v1678
          %v1695 = vpack.c.b16 %v1679, %v1679
          %s1712 = sshra.s32 %s785, 3
          %s1713 = sand.u32 %s785, 7
          %s1714 = smul.addr %s1712, 4
          %s1715 = scalar_lea.vmem [#allocation7], %s1714
          %1716 = vst [vmem:[%s1715] sm:$0xf] %v1680
          %1717 = vst [vmem:[%s1715 + $0x4] sm:$0xf] %v1681
          %1718 = vst [vmem:[%s1715 + $0x8] sm:$0xf] %v1682
          %1719 = vst [vmem:[%s1715 + $0xc] sm:$0xf] %v1683
          %1720 = vst [vmem:[%s1715 + $0x10] sm:$0xf] %v1684
          %1721 = vst [vmem:[%s1715 + $0x14] sm:$0xf] %v1685
          %1722 = vst [vmem:[%s1715 + $0x18] sm:$0xf] %v1686
          %1723 = vst [vmem:[%s1715 + $0x1c] sm:$0xf] %v1687
          %1724 = vst [vmem:[%s1715 + $0x20] sm:$0xf] %v1688
          %1725 = vst [vmem:[%s1715 + $0x24] sm:$0xf] %v1689
          %1726 = vst [vmem:[%s1715 + $0x28] sm:$0xf] %v1690
          %1727 = vst [vmem:[%s1715 + $0x2c] sm:$0xf] %v1691
          %1728 = vst [vmem:[%s1715 + $0x30] sm:$0xf] %v1692
          %1729 = vst [vmem:[%s1715 + $0x34] sm:$0xf] %v1693
          %1730 = vst [vmem:[%s1715 + $0x38] sm:$0xf] %v1694
          %1731 = vst [vmem:[%s1715 + $0x3c] sm:$0xf] %v1695
        $region52: #{tpu_custom_call.1} parent=35 // pred_fallthru
          _
        // Predicated region
        $region53: #{tpu_custom_call.1} parent=35 // pred_check
          %p1732 = pneg %p131
        $region54: #{tpu_custom_call.1} parent=35 // pred_check_branch
          %1734 = sbr.rel (%p1732) target = $region56
        $region55: #{tpu_custom_call.1} parent=35 // pred_region
          %s1736 = ssub.s32 2048, 2048
          %1737 = vsyncadd [#allocation6], %s1736
          %s1738 = sshll.u32 [#allocation7], 4
          %s1739 = int_to_ptr.vmem [resolvable:$true] %s1738
          %1744 = dma.vmem_to_hbm [thread:$0]  %s1739, 2048, %s4, [#allocation6], 64, 64, 4
        $region56: #{tpu_custom_call.1} parent=35 // pred_fallthru
          _
        // Predicated region
        $region57: #{tpu_custom_call.1} parent=35 // pred_check
          %p1745 = pneg %p131
        $region58: #{tpu_custom_call.1} parent=35 // pred_check_branch
          %1747 = sbr.rel (%p1745) target = $region60
        $region59: #{tpu_custom_call.1} parent=35 // pred_region
          %1748 = dma.done [#allocation6], 2048
        $region60: #{tpu_custom_call.1} parent=35 // pred_fallthru
          _
      $region36: #{tpu_custom_call.1} parent=5 // pred_fallthru
        _
      %p1749 = scmp.le.s32.totalorder 2, %s12
      // Predicated region
      $region61: #{tpu_custom_call.1} parent=5 // pred_check
        %p1750 = pneg %p1749
      $region62: #{tpu_custom_call.1} parent=5 // pred_check_branch
        %1752 = sbr.rel (%p1750) target = $region64
      $region63: #{tpu_custom_call.1} parent=5 // pred_region
        %s1753 = ssub.s32 %s12, 2
      $region64: #{tpu_custom_call.1} parent=5 // pred_fallthru
        _
    $region6: #{tpu_custom_call.1} parent=1 // loop_footer
      %s16 = sadd.s32 1, %s12
    $region7: #{tpu_custom_call.1} parent=1 // loop_footer_branch
      %11 = sbr.rel target = $region3
    $region8: #{tpu_custom_call.1} parent=1 // loop_exit
      _
    %1754 = vsyncpa [#allocation5], 1
    %s1755 = scalar_lea.sflag [#allocation5], 1
    %1756 = vsyncpa %s1755, 1
    %1757 = vsyncpa [#allocation6], 1
    %s1758 = scalar_lea.sflag [#allocation6], 1
    %1759 = vsyncpa %s1758, 1

</llo_original>
